<compile_context>
chip_gen: v7x
topology: tpu7x:2x2x1
jax: 0.10.0
libtpu: 0.0.40
codegen_flags: <defaults>
</compile_context>

<pallas_src>
import functools

import jax
import jax.numpy as jnp
from jax.experimental import pallas as pl
from jax.experimental.pallas import tpu as pltpu


# ----------------------------------------------------------------------------
# Fused kernel: object encoder + sample encoder + prediction head
# One object (and its G grasps) per grid step.
# ----------------------------------------------------------------------------
def fused_discriminator_kernel(pts_ref, g_ref,
                               w1_ref, b1_ref, w2_ref, b2_ref,
                               ws1_ref, bs1_ref, ws2_ref, bs2_ref,
                               wh1s_ref, wh1o_ref, bh1_ref,
                               wh2_ref, bh2_ref, wh3t_ref, bh3_ref,
                               out_ref, *, kappa):
    # -------- object encoder: shared per-point MLP + max pool --------------
    pts = pts_ref[0] * kappa                                          # [P, 3]
    # K=3 contraction on the VPU (broadcast FMA), MXU not worth it at depth 3.
    h = (pts[:, 0:1] * w1_ref[0:1, :]
         + pts[:, 1:2] * w1_ref[1:2, :]
         + pts[:, 2:3] * w1_ref[2:3, :]
         + b1_ref[...])
    h = jnp.maximum(h, 0.0)                                           # [P, H]
    f = jnp.dot(h, w2_ref[...], preferred_element_type=jnp.float32)   # [P, D]
    # bias hoisted past the max pool: max(f + b2) == max(f) + b2
    obj = jnp.max(f, axis=0, keepdims=True) + b2_ref[...]             # [1, D]

    # -------- sample encoder ('r3_6d' features, mlp pose_repr) -------------
    g = g_ref[0]                                                      # [G, 16]
    # matrix_to_rt(r3_6d) folded in: flat 4x4 row-major indices
    #   translation (x kappa): 3, 7, 11 ; R[:,0]: 0, 4, 8 ; R[:,1]: 1, 5, 9
    cols = ((3, kappa), (7, kappa), (11, kappa),
            (0, 1.0), (4, 1.0), (8, 1.0),
            (1, 1.0), (5, 1.0), (9, 1.0))
    s = bs1_ref[...]                                                  # [1, E]
    for r, (c, sc) in enumerate(cols):                                # K=9 on VPU
        col = g[:, c:c + 1]
        if sc != 1.0:
            col = col * sc
        s = s + col * ws1_ref[r:r + 1, :]
    s = jnp.maximum(s, 0.0)                                           # [G, E]
    s = (jnp.dot(s, ws2_ref[...], preferred_element_type=jnp.float32)
         + bs2_ref[...])                                              # [G, E]

    # -------- prediction head (concat replaced by split wh1) ---------------
    # total_embedding = [sample_emb, obj_emb]  =>  t @ wh1 = s@wh1_s + obj@wh1_o
    h1 = (jnp.dot(s, wh1s_ref[...], preferred_element_type=jnp.float32)
          + jnp.dot(obj, wh1o_ref[...], preferred_element_type=jnp.float32)
          + bh1_ref[...])
    h1 = jnp.maximum(h1, 0.0)                                         # [G, T/2]
    h2 = jnp.maximum(
        jnp.dot(h1, wh2_ref[...], preferred_element_type=jnp.float32)
        + bh2_ref[...], 0.0)                                          # [G, T/4]
    # Lane-dense logits row: [1, G] instead of [G, 1] masked stores.
    logits = (jnp.dot(wh3t_ref[...], h2.T,
                      preferred_element_type=jnp.float32)
              + bh3_ref[...])                                         # [1, G]
    out_ref[...] = logits[None]                                       # [1, 1, G]


# ----------------------------------------------------------------------------
# Wrapper: BlockSpecs / grid, small weight re-packing, sigmoid
# ----------------------------------------------------------------------------
def grasp_gen_discriminator_forward(points, grasps, params, kappa=3.3):
    """points: [O, P, 3], grasps: [O*G, 4, 4] -> (logits [O,G,1], conf [O,G,1]).

    Grasps are assumed grouped contiguously per object (same assumption as the
    reference module's offset2batch / reshape([O, G, 1])).
    """
    O, P, _ = points.shape
    OG = grasps.shape[0]
    G = OG // O
    assert O * G == OG, "grasps must be grouped contiguously per object"
    scale = 1.0 if (kappa is None or kappa <= 0) else float(kappa)

    # Flatten each 4x4 transform row-major; feature extraction happens in-kernel.
    g_flat = grasps.reshape(O, G, 16)

    E = params["ws2"].shape[1]           # sample_embed_dim
    wh1_s = params["wh1"][:E, :]         # rows acting on the sample embedding
    wh1_o = params["wh1"][E:, :]         # rows acting on the object embedding
    wh3_t = params["wh3"].T              # [1, T/4] for the lane-dense last layer

    weights = (params["w1"], params["b1"], params["w2"], params["b2"],
               params["ws1"], params["bs1"], params["ws2"], params["bs2"],
               wh1_s, wh1_o, params["bh1"],
               params["wh2"], params["bh2"], wh3_t, params["bh3"])
    weight_specs = [pl.BlockSpec(w.shape, lambda i: (0, 0)) for w in weights]

    kernel = functools.partial(fused_discriminator_kernel, kappa=scale)

    logits_og = pl.pallas_call(
        kernel,
        out_shape=jax.ShapeDtypeStruct((O, 1, G), jnp.float32),
        grid=(O,),
        in_specs=[
            pl.BlockSpec((1, P, 3), lambda i: (i, 0, 0)),     # points (one object)
            pl.BlockSpec((1, G, 16), lambda i: (i, 0, 0)),    # grasps (that object)
        ] + weight_specs,
        out_specs=pl.BlockSpec((1, 1, G), lambda i: (i, 0, 0)),
        compiler_params=pltpu.CompilerParams(
            dimension_semantics=("parallel",),                # megacore on v7x
            vmem_limit_bytes=32 * 1024 * 1024),
    )(points, g_flat, *weights)

    logits = jnp.transpose(logits_og, (0, 2, 1))              # [O, G, 1]
    conf = jax.nn.sigmoid(logits)
    return logits, conf


# ----------------------------------------------------------------------------
# Deterministic parameter construction (matches the PyTorch parameterisation)
# ----------------------------------------------------------------------------
def make_params(key, num_obs_dim=64, sample_embed_dim=64, enc_hidden=64,
                output_dim=9):
    T = sample_embed_dim + num_obs_dim
    ks = jax.random.split(key, 8)

    def lin(k, fan_in, fan_out):
        kw, kb = jax.random.split(k)
        lim = 1.0 / jnp.sqrt(fan_in)
        w = jax.random.uniform(kw, (fan_in, fan_out), jnp.float32, -lim, lim)
        b = jax.random.uniform(kb, (1, fan_out), jnp.float32, -lim, lim)
        return w, b

    p = {}
    # object encoder stand-in (shared per-point MLP 3 -> H -> D, max pool)
    p["w1"], p["b1"] = lin(ks[0], 3, enc_hidden)
    p["w2"], p["b2"] = lin(ks[1], enc_hidden, num_obs_dim)
    # sample encoder: Linear(9, E) -> ReLU -> Linear(E, E)
    p["ws1"], p["bs1"] = lin(ks[2], output_dim, sample_embed_dim)
    p["ws2"], p["bs2"] = lin(ks[3], sample_embed_dim, sample_embed_dim)
    # prediction head: Linear(T, T/2) -> ReLU -> Linear(T/2, T/4) -> ReLU -> Linear(T/4, 1)
    p["wh1"], p["bh1"] = lin(ks[4], T, T // 2)
    p["wh2"], p["bh2"] = lin(ks[5], T // 2, T // 4)
    p["wh3"], p["bh3"] = lin(ks[6], T // 4, 1)
    return p


if __name__ == "__main__":
    key = jax.random.PRNGKey(0)
    k_pts, k_rot, k_trs, k_par = jax.random.split(key, 4)

    num_objects = 2
    num_grasps = 8
    num_points = 128

    points = jax.random.normal(k_pts, (num_objects, num_points, 3), jnp.float32)

    # Build valid homogeneous grasp transforms [O*G, 4, 4]
    B = num_objects * num_grasps
    raw = jax.random.normal(k_rot, (B, 3, 3), jnp.float32)
    q, _ = jnp.linalg.qr(raw)                                         # rotations
    t = 0.1 * jax.random.normal(k_trs, (B, 3, 1), jnp.float32)
    top = jnp.concatenate([q, t], axis=-1)                            # [B, 3, 4]
    bottom = jnp.tile(jnp.array([[[0.0, 0.0, 0.0, 1.0]]], jnp.float32), (B, 1, 1))
    grasps = jnp.concatenate([top, bottom], axis=1)                   # [B, 4, 4]

    params = make_params(k_par)

    logits, conf = grasp_gen_discriminator_forward(points, grasps, params, kappa=3.3)
    jax.block_until_ready((logits, conf))

    assert logits.shape == (num_objects, num_grasps, 1)
    assert conf.shape == (num_objects, num_grasps, 1)
    assert bool(jnp.all(jnp.isfinite(logits)))
    assert bool(jnp.all((conf >= 0.0) & (conf <= 1.0)))
    print("KERNEL_OK")
</pallas_src>

<mosaic_0001>
module attributes {stable_mosaic.version = 11 : i64} {
  func.func @fused_discriminator_kernel(%arg0: i32, %arg1: memref<1x128x3xf32, #tpu.memory_space<vmem>>, %arg2: memref<1x8x16xf32, #tpu.memory_space<vmem>>, %arg3: memref<3x64xf32, #tpu.memory_space<vmem>>, %arg4: memref<1x64xf32, #tpu.memory_space<vmem>>, %arg5: memref<64x64xf32, #tpu.memory_space<vmem>>, %arg6: memref<1x64xf32, #tpu.memory_space<vmem>>, %arg7: memref<9x64xf32, #tpu.memory_space<vmem>>, %arg8: memref<1x64xf32, #tpu.memory_space<vmem>>, %arg9: memref<64x64xf32, #tpu.memory_space<vmem>>, %arg10: memref<1x64xf32, #tpu.memory_space<vmem>>, %arg11: memref<64x64xf32, #tpu.memory_space<vmem>>, %arg12: memref<64x64xf32, #tpu.memory_space<vmem>>, %arg13: memref<1x64xf32, #tpu.memory_space<vmem>>, %arg14: memref<64x32xf32, #tpu.memory_space<vmem>>, %arg15: memref<1x32xf32, #tpu.memory_space<vmem>>, %arg16: memref<1x32xf32, #tpu.memory_space<vmem>>, %arg17: memref<1x1xf32, #tpu.memory_space<vmem>>, %arg18: memref<1x1x8xf32, #tpu.memory_space<vmem>>) attributes {dimension_semantics = [#tpu.dimension_semantics<parallel>], iteration_bounds = array<i64: 2>, scalar_prefetch = 0 : i64, scratch_operands = 0 : i64, tpu.core_type = #tpu.core_type<tc>, window_params = [{transform_indices = @transform_0, window_bounds = array<i64: 1, 128, 3>}, {transform_indices = @transform_1, window_bounds = array<i64: 1, 8, 16>}, {pipeline_mode = #tpu.pipeline_mode<synchronous>, transform_indices = @transform_2, window_bounds = array<i64: 3, 64>}, {pipeline_mode = #tpu.pipeline_mode<synchronous>, transform_indices = @transform_3, window_bounds = array<i64: 1, 64>}, {pipeline_mode = #tpu.pipeline_mode<synchronous>, transform_indices = @transform_4, window_bounds = array<i64: 64, 64>}, {pipeline_mode = #tpu.pipeline_mode<synchronous>, transform_indices = @transform_5, window_bounds = array<i64: 1, 64>}, {pipeline_mode = #tpu.pipeline_mode<synchronous>, transform_indices = @transform_6, window_bounds = array<i64: 9, 64>}, {pipeline_mode = #tpu.pipeline_mode<synchronous>, transform_indices = @transform_7, window_bounds = array<i64: 1, 64>}, {pipeline_mode = #tpu.pipeline_mode<synchronous>, transform_indices = @transform_8, window_bounds = array<i64: 64, 64>}, {pipeline_mode = #tpu.pipeline_mode<synchronous>, transform_indices = @transform_9, window_bounds = array<i64: 1, 64>}, {pipeline_mode = #tpu.pipeline_mode<synchronous>, transform_indices = @transform_10, window_bounds = array<i64: 64, 64>}, {pipeline_mode = #tpu.pipeline_mode<synchronous>, transform_indices = @transform_11, window_bounds = array<i64: 64, 64>}, {pipeline_mode = #tpu.pipeline_mode<synchronous>, transform_indices = @transform_12, window_bounds = array<i64: 1, 64>}, {pipeline_mode = #tpu.pipeline_mode<synchronous>, transform_indices = @transform_13, window_bounds = array<i64: 64, 32>}, {pipeline_mode = #tpu.pipeline_mode<synchronous>, transform_indices = @transform_14, window_bounds = array<i64: 1, 32>}, {pipeline_mode = #tpu.pipeline_mode<synchronous>, transform_indices = @transform_15, window_bounds = array<i64: 1, 32>}, {pipeline_mode = #tpu.pipeline_mode<synchronous>, transform_indices = @transform_16, window_bounds = array<i64: 1, 1>}, {transform_indices = @transform_17, window_bounds = array<i64: 1, 1, 8>}]} {
    %c0 = arith.constant 0 : index
    %c0_0 = arith.constant 0 : index
    %c0_1 = arith.constant 0 : index
    %0 = vector.load %arg1[%c0, %c0_0, %c0_1] : memref<1x128x3xf32, #tpu.memory_space<vmem>>, vector<1x128x3xf32>
    %1 = vector.shape_cast %0 : vector<1x128x3xf32> to vector<128x3xf32>
    %cst = arith.constant 3.300000e+00 : f32
    %2 = vector.broadcast %cst : f32 to vector<128x3xf32>
    %3 = arith.mulf %1, %2 : vector<128x3xf32>
    %4 = vector.extract_strided_slice %3 {offsets = [0, 0], sizes = [128, 1], strides = [1, 1]} : vector<128x3xf32> to vector<128x1xf32>
    %c0_2 = arith.constant 0 : index
    %c0_3 = arith.constant 0 : index
    %5 = vector.load %arg3[%c0_2, %c0_3] : memref<3x64xf32, #tpu.memory_space<vmem>>, vector<1x64xf32>
    %6 = vector.broadcast %4 : vector<128x1xf32> to vector<128x64xf32>
    %7 = vector.broadcast %5 : vector<1x64xf32> to vector<128x64xf32>
    %8 = arith.mulf %6, %7 : vector<128x64xf32>
    %9 = vector.extract_strided_slice %3 {offsets = [0, 1], sizes = [128, 1], strides = [1, 1]} : vector<128x3xf32> to vector<128x1xf32>
    %c1 = arith.constant 1 : index
    %c0_4 = arith.constant 0 : index
    %10 = vector.load %arg3[%c1, %c0_4] : memref<3x64xf32, #tpu.memory_space<vmem>>, vector<1x64xf32>
    %11 = vector.broadcast %9 : vector<128x1xf32> to vector<128x64xf32>
    %12 = vector.broadcast %10 : vector<1x64xf32> to vector<128x64xf32>
    %13 = arith.mulf %11, %12 : vector<128x64xf32>
    %14 = arith.addf %8, %13 : vector<128x64xf32>
    %15 = vector.extract_strided_slice %3 {offsets = [0, 2], sizes = [128, 1], strides = [1, 1]} : vector<128x3xf32> to vector<128x1xf32>
    %c2 = arith.constant 2 : index
    %c0_5 = arith.constant 0 : index
    %16 = vector.load %arg3[%c2, %c0_5] : memref<3x64xf32, #tpu.memory_space<vmem>>, vector<1x64xf32>
    %17 = vector.broadcast %15 : vector<128x1xf32> to vector<128x64xf32>
    %18 = vector.broadcast %16 : vector<1x64xf32> to vector<128x64xf32>
    %19 = arith.mulf %17, %18 : vector<128x64xf32>
    %20 = arith.addf %14, %19 : vector<128x64xf32>
    %c0_6 = arith.constant 0 : index
    %c0_7 = arith.constant 0 : index
    %21 = vector.load %arg4[%c0_6, %c0_7] : memref<1x64xf32, #tpu.memory_space<vmem>>, vector<1x64xf32>
    %22 = vector.broadcast %21 : vector<1x64xf32> to vector<128x64xf32>
    %23 = arith.addf %20, %22 : vector<128x64xf32>
    %cst_8 = arith.constant 0.000000e+00 : f32
    %24 = vector.broadcast %cst_8 : f32 to vector<128x64xf32>
    %25 = arith.maximumf %23, %24 : vector<128x64xf32>
    %c0_9 = arith.constant 0 : index
    %c0_10 = arith.constant 0 : index
    %26 = vector.load %arg5[%c0_9, %c0_10] : memref<64x64xf32, #tpu.memory_space<vmem>>, vector<64x64xf32>
    %cst_11 = arith.constant dense<0.000000e+00> : vector<128x64xf32>
    %27 = tpu.matmul %25, %26, %cst_11 {dimension_numbers = #tpu.dot_dimension_numbers<[1], [0], [0], [1], [0, 0, 1, 1], [], []>} : vector<128x64xf32>, vector<64x64xf32>, vector<128x64xf32> -> vector<128x64xf32>
    %cst_12 = arith.constant dense<0xFF800000> : vector<64xf32>
    %28 = vector.multi_reduction <maximumf>, %27, %cst_12 [0] : vector<128x64xf32> to vector<64xf32>
    %29 = vector.shape_cast %28 : vector<64xf32> to vector<1x64xf32>
    %c0_13 = arith.constant 0 : index
    %c0_14 = arith.constant 0 : index
    %30 = vector.load %arg6[%c0_13, %c0_14] : memref<1x64xf32, #tpu.memory_space<vmem>>, vector<1x64xf32>
    %31 = arith.addf %29, %30 : vector<1x64xf32>
    %c0_15 = arith.constant 0 : index
    %c0_16 = arith.constant 0 : index
    %c0_17 = arith.constant 0 : index
    %32 = vector.load %arg2[%c0_15, %c0_16, %c0_17] : memref<1x8x16xf32, #tpu.memory_space<vmem>>, vector<1x8x16xf32>
    %33 = vector.shape_cast %32 : vector<1x8x16xf32> to vector<8x16xf32>
    %c0_18 = arith.constant 0 : index
    %c0_19 = arith.constant 0 : index
    %34 = vector.load %arg8[%c0_18, %c0_19] : memref<1x64xf32, #tpu.memory_space<vmem>>, vector<1x64xf32>
    %35 = vector.extract_strided_slice %33 {offsets = [0, 3], sizes = [8, 1], strides = [1, 1]} : vector<8x16xf32> to vector<8x1xf32>
    %cst_20 = arith.constant 3.300000e+00 : f32
    %36 = vector.broadcast %cst_20 : f32 to vector<8x1xf32>
    %37 = arith.mulf %35, %36 : vector<8x1xf32>
    %c0_21 = arith.constant 0 : index
    %c0_22 = arith.constant 0 : index
    %38 = vector.load %arg7[%c0_21, %c0_22] : memref<9x64xf32, #tpu.memory_space<vmem>>, vector<1x64xf32>
    %39 = vector.broadcast %37 : vector<8x1xf32> to vector<8x64xf32>
    %40 = vector.broadcast %38 : vector<1x64xf32> to vector<8x64xf32>
    %41 = arith.mulf %39, %40 : vector<8x64xf32>
    %42 = vector.broadcast %34 : vector<1x64xf32> to vector<8x64xf32>
    %43 = arith.addf %42, %41 : vector<8x64xf32>
    %44 = vector.extract_strided_slice %33 {offsets = [0, 7], sizes = [8, 1], strides = [1, 1]} : vector<8x16xf32> to vector<8x1xf32>
    %cst_23 = arith.constant 3.300000e+00 : f32
    %45 = vector.broadcast %cst_23 : f32 to vector<8x1xf32>
    %46 = arith.mulf %44, %45 : vector<8x1xf32>
    %c1_24 = arith.constant 1 : index
    %c0_25 = arith.constant 0 : index
    %47 = vector.load %arg7[%c1_24, %c0_25] : memref<9x64xf32, #tpu.memory_space<vmem>>, vector<1x64xf32>
    %48 = vector.broadcast %46 : vector<8x1xf32> to vector<8x64xf32>
    %49 = vector.broadcast %47 : vector<1x64xf32> to vector<8x64xf32>
    %50 = arith.mulf %48, %49 : vector<8x64xf32>
    %51 = arith.addf %43, %50 : vector<8x64xf32>
    %52 = vector.extract_strided_slice %33 {offsets = [0, 11], sizes = [8, 1], strides = [1, 1]} : vector<8x16xf32> to vector<8x1xf32>
    %cst_26 = arith.constant 3.300000e+00 : f32
    %53 = vector.broadcast %cst_26 : f32 to vector<8x1xf32>
    %54 = arith.mulf %52, %53 : vector<8x1xf32>
    %c2_27 = arith.constant 2 : index
    %c0_28 = arith.constant 0 : index
    %55 = vector.load %arg7[%c2_27, %c0_28] : memref<9x64xf32, #tpu.memory_space<vmem>>, vector<1x64xf32>
    %56 = vector.broadcast %54 : vector<8x1xf32> to vector<8x64xf32>
    %57 = vector.broadcast %55 : vector<1x64xf32> to vector<8x64xf32>
    %58 = arith.mulf %56, %57 : vector<8x64xf32>
    %59 = arith.addf %51, %58 : vector<8x64xf32>
    %60 = vector.extract_strided_slice %33 {offsets = [0, 0], sizes = [8, 1], strides = [1, 1]} : vector<8x16xf32> to vector<8x1xf32>
    %c3 = arith.constant 3 : index
    %c0_29 = arith.constant 0 : index
    %61 = vector.load %arg7[%c3, %c0_29] : memref<9x64xf32, #tpu.memory_space<vmem>>, vector<1x64xf32>
    %62 = vector.broadcast %60 : vector<8x1xf32> to vector<8x64xf32>
    %63 = vector.broadcast %61 : vector<1x64xf32> to vector<8x64xf32>
    %64 = arith.mulf %62, %63 : vector<8x64xf32>
    %65 = arith.addf %59, %64 : vector<8x64xf32>
    %66 = vector.extract_strided_slice %33 {offsets = [0, 4], sizes = [8, 1], strides = [1, 1]} : vector<8x16xf32> to vector<8x1xf32>
    %c4 = arith.constant 4 : index
    %c0_30 = arith.constant 0 : index
    %67 = vector.load %arg7[%c4, %c0_30] : memref<9x64xf32, #tpu.memory_space<vmem>>, vector<1x64xf32>
    %68 = vector.broadcast %66 : vector<8x1xf32> to vector<8x64xf32>
    %69 = vector.broadcast %67 : vector<1x64xf32> to vector<8x64xf32>
    %70 = arith.mulf %68, %69 : vector<8x64xf32>
    %71 = arith.addf %65, %70 : vector<8x64xf32>
    %72 = vector.extract_strided_slice %33 {offsets = [0, 8], sizes = [8, 1], strides = [1, 1]} : vector<8x16xf32> to vector<8x1xf32>
    %c5 = arith.constant 5 : index
    %c0_31 = arith.constant 0 : index
    %73 = vector.load %arg7[%c5, %c0_31] : memref<9x64xf32, #tpu.memory_space<vmem>>, vector<1x64xf32>
    %74 = vector.broadcast %72 : vector<8x1xf32> to vector<8x64xf32>
    %75 = vector.broadcast %73 : vector<1x64xf32> to vector<8x64xf32>
    %76 = arith.mulf %74, %75 : vector<8x64xf32>
    %77 = arith.addf %71, %76 : vector<8x64xf32>
    %78 = vector.extract_strided_slice %33 {offsets = [0, 1], sizes = [8, 1], strides = [1, 1]} : vector<8x16xf32> to vector<8x1xf32>
    %c6 = arith.constant 6 : index
    %c0_32 = arith.constant 0 : index
    %79 = vector.load %arg7[%c6, %c0_32] : memref<9x64xf32, #tpu.memory_space<vmem>>, vector<1x64xf32>
    %80 = vector.broadcast %78 : vector<8x1xf32> to vector<8x64xf32>
    %81 = vector.broadcast %79 : vector<1x64xf32> to vector<8x64xf32>
    %82 = arith.mulf %80, %81 : vector<8x64xf32>
    %83 = arith.addf %77, %82 : vector<8x64xf32>
    %84 = vector.extract_strided_slice %33 {offsets = [0, 5], sizes = [8, 1], strides = [1, 1]} : vector<8x16xf32> to vector<8x1xf32>
    %c7 = arith.constant 7 : index
    %c0_33 = arith.constant 0 : index
    %85 = vector.load %arg7[%c7, %c0_33] : memref<9x64xf32, #tpu.memory_space<vmem>>, vector<1x64xf32>
    %86 = vector.broadcast %84 : vector<8x1xf32> to vector<8x64xf32>
    %87 = vector.broadcast %85 : vector<1x64xf32> to vector<8x64xf32>
    %88 = arith.mulf %86, %87 : vector<8x64xf32>
    %89 = arith.addf %83, %88 : vector<8x64xf32>
    %90 = vector.extract_strided_slice %33 {offsets = [0, 9], sizes = [8, 1], strides = [1, 1]} : vector<8x16xf32> to vector<8x1xf32>
    %c8 = arith.constant 8 : index
    %c0_34 = arith.constant 0 : index
    %91 = vector.load %arg7[%c8, %c0_34] : memref<9x64xf32, #tpu.memory_space<vmem>>, vector<1x64xf32>
    %92 = vector.broadcast %90 : vector<8x1xf32> to vector<8x64xf32>
    %93 = vector.broadcast %91 : vector<1x64xf32> to vector<8x64xf32>
    %94 = arith.mulf %92, %93 : vector<8x64xf32>
    %95 = arith.addf %89, %94 : vector<8x64xf32>
    %cst_35 = arith.constant 0.000000e+00 : f32
    %96 = vector.broadcast %cst_35 : f32 to vector<8x64xf32>
    %97 = arith.maximumf %95, %96 : vector<8x64xf32>
    %c0_36 = arith.constant 0 : index
    %c0_37 = arith.constant 0 : index
    %98 = vector.load %arg9[%c0_36, %c0_37] : memref<64x64xf32, #tpu.memory_space<vmem>>, vector<64x64xf32>
    %cst_38 = arith.constant dense<0.000000e+00> : vector<8x64xf32>
    %99 = tpu.matmul %97, %98, %cst_38 {dimension_numbers = #tpu.dot_dimension_numbers<[1], [0], [0], [1], [0, 0, 1, 1], [], []>} : vector<8x64xf32>, vector<64x64xf32>, vector<8x64xf32> -> vector<8x64xf32>
    %c0_39 = arith.constant 0 : index
    %c0_40 = arith.constant 0 : index
    %100 = vector.load %arg10[%c0_39, %c0_40] : memref<1x64xf32, #tpu.memory_space<vmem>>, vector<1x64xf32>
    %101 = vector.broadcast %100 : vector<1x64xf32> to vector<8x64xf32>
    %102 = arith.addf %99, %101 : vector<8x64xf32>
    %c0_41 = arith.constant 0 : index
    %c0_42 = arith.constant 0 : index
    %103 = vector.load %arg11[%c0_41, %c0_42] : memref<64x64xf32, #tpu.memory_space<vmem>>, vector<64x64xf32>
    %cst_43 = arith.constant dense<0.000000e+00> : vector<8x64xf32>
    %104 = tpu.matmul %102, %103, %cst_43 {dimension_numbers = #tpu.dot_dimension_numbers<[1], [0], [0], [1], [0, 0, 1, 1], [], []>} : vector<8x64xf32>, vector<64x64xf32>, vector<8x64xf32> -> vector<8x64xf32>
    %c0_44 = arith.constant 0 : index
    %c0_45 = arith.constant 0 : index
    %105 = vector.load %arg12[%c0_44, %c0_45] : memref<64x64xf32, #tpu.memory_space<vmem>>, vector<64x64xf32>
    %cst_46 = arith.constant dense<0.000000e+00> : vector<1x64xf32>
    %106 = tpu.matmul %31, %105, %cst_46 {dimension_numbers = #tpu.dot_dimension_numbers<[1], [0], [0], [1], [0, 0, 1, 1], [], []>} : vector<1x64xf32>, vector<64x64xf32>, vector<1x64xf32> -> vector<1x64xf32>
    %107 = vector.broadcast %106 : vector<1x64xf32> to vector<8x64xf32>
    %108 = arith.addf %104, %107 : vector<8x64xf32>
    %c0_47 = arith.constant 0 : index
    %c0_48 = arith.constant 0 : index
    %109 = vector.load %arg13[%c0_47, %c0_48] : memref<1x64xf32, #tpu.memory_space<vmem>>, vector<1x64xf32>
    %110 = vector.broadcast %109 : vector<1x64xf32> to vector<8x64xf32>
    %111 = arith.addf %108, %110 : vector<8x64xf32>
    %cst_49 = arith.constant 0.000000e+00 : f32
    %112 = vector.broadcast %cst_49 : f32 to vector<8x64xf32>
    %113 = arith.maximumf %111, %112 : vector<8x64xf32>
    %c0_50 = arith.constant 0 : index
    %c0_51 = arith.constant 0 : index
    %114 = vector.load %arg14[%c0_50, %c0_51] : memref<64x32xf32, #tpu.memory_space<vmem>>, vector<64x32xf32>
    %cst_52 = arith.constant dense<0.000000e+00> : vector<8x32xf32>
    %115 = tpu.matmul %113, %114, %cst_52 {dimension_numbers = #tpu.dot_dimension_numbers<[1], [0], [0], [1], [0, 0, 1, 1], [], []>} : vector<8x64xf32>, vector<64x32xf32>, vector<8x32xf32> -> vector<8x32xf32>
    %c0_53 = arith.constant 0 : index
    %c0_54 = arith.constant 0 : index
    %116 = vector.load %arg15[%c0_53, %c0_54] : memref<1x32xf32, #tpu.memory_space<vmem>>, vector<1x32xf32>
    %117 = vector.broadcast %116 : vector<1x32xf32> to vector<8x32xf32>
    %118 = arith.addf %115, %117 : vector<8x32xf32>
    %cst_55 = arith.constant 0.000000e+00 : f32
    %119 = vector.broadcast %cst_55 : f32 to vector<8x32xf32>
    %120 = arith.maximumf %118, %119 : vector<8x32xf32>
    %c0_56 = arith.constant 0 : index
    %c0_57 = arith.constant 0 : index
    %121 = vector.load %arg16[%c0_56, %c0_57] : memref<1x32xf32, #tpu.memory_space<vmem>>, vector<1x32xf32>
    %122 = tpu.transpose %120, [1, 0] : vector<8x32xf32> -> vector<32x8xf32>
    %cst_58 = arith.constant dense<0.000000e+00> : vector<1x8xf32>
    %123 = tpu.matmul %121, %122, %cst_58 {dimension_numbers = #tpu.dot_dimension_numbers<[1], [0], [0], [1], [0, 0, 1, 1], [], []>} : vector<1x32xf32>, vector<32x8xf32>, vector<1x8xf32> -> vector<1x8xf32>
    %c0_59 = arith.constant 0 : index
    %c0_60 = arith.constant 0 : index
    %124 = vector.load %arg17[%c0_59, %c0_60] : memref<1x1xf32, #tpu.memory_space<vmem>>, vector<1x1xf32>
    %125 = vector.broadcast %124 : vector<1x1xf32> to vector<1x8xf32>
    %126 = arith.addf %123, %125 : vector<1x8xf32>
    %127 = vector.shape_cast %126 : vector<1x8xf32> to vector<1x1x8xf32>
    %c0_61 = arith.constant 0 : index
    %c0_62 = arith.constant 0 : index
    %c0_63 = arith.constant 0 : index
    %128 = vector.load %arg18[%c0_61, %c0_62, %c0_63] : memref<1x1x8xf32, #tpu.memory_space<vmem>>, vector<1x1x8xf32>
    tpu.vector_store %arg18[%c0_61, %c0_62, %c0_63], %127 {strides = array<i32>} : memref<1x1x8xf32, #tpu.memory_space<vmem>>, vector<1x1x8xf32>,
    return
  }
  func.func @transform_0(%arg0: i32) -> (i32, i32, i32) {
    %c0_i32 = arith.constant 0 : i32
    %c0_i32_0 = arith.constant 0 : i32
    %c0_i32_1 = arith.constant 0 : i32
    return %arg0, %c0_i32, %c0_i32_0 : i32, i32, i32
  }
  func.func @transform_1(%arg0: i32) -> (i32, i32, i32) {
    %c0_i32 = arith.constant 0 : i32
    %c0_i32_0 = arith.constant 0 : i32
    %c0_i32_1 = arith.constant 0 : i32
    return %arg0, %c0_i32, %c0_i32_0 : i32, i32, i32
  }
  func.func @transform_2(%arg0: i32) -> (i32, i32) {
    %c0_i32 = arith.constant 0 : i32
    %c0_i32_0 = arith.constant 0 : i32
    %c0_i32_1 = arith.constant 0 : i32
    return %c0_i32, %c0_i32_0 : i32, i32
  }
  func.func @transform_3(%arg0: i32) -> (i32, i32) {
    %c0_i32 = arith.constant 0 : i32
    %c0_i32_0 = arith.constant 0 : i32
    %c0_i32_1 = arith.constant 0 : i32
    return %c0_i32, %c0_i32_0 : i32, i32
  }
  func.func @transform_4(%arg0: i32) -> (i32, i32) {
    %c0_i32 = arith.constant 0 : i32
    %c0_i32_0 = arith.constant 0 : i32
    %c0_i32_1 = arith.constant 0 : i32
    return %c0_i32, %c0_i32_0 : i32, i32
  }
  func.func @transform_5(%arg0: i32) -> (i32, i32) {
    %c0_i32 = arith.constant 0 : i32
    %c0_i32_0 = arith.constant 0 : i32
    %c0_i32_1 = arith.constant 0 : i32
    return %c0_i32, %c0_i32_0 : i32, i32
  }
  func.func @transform_6(%arg0: i32) -> (i32, i32) {
    %c0_i32 = arith.constant 0 : i32
    %c0_i32_0 = arith.constant 0 : i32
    %c0_i32_1 = arith.constant 0 : i32
    return %c0_i32, %c0_i32_0 : i32, i32
  }
  func.func @transform_7(%arg0: i32) -> (i32, i32) {
    %c0_i32 = arith.constant 0 : i32
    %c0_i32_0 = arith.constant 0 : i32
    %c0_i32_1 = arith.constant 0 : i32
    return %c0_i32, %c0_i32_0 : i32, i32
  }
  func.func @transform_8(%arg0: i32) -> (i32, i32) {
    %c0_i32 = arith.constant 0 : i32
    %c0_i32_0 = arith.constant 0 : i32
    %c0_i32_1 = arith.constant 0 : i32
    return %c0_i32, %c0_i32_0 : i32, i32
  }
  func.func @transform_9(%arg0: i32) -> (i32, i32) {
    %c0_i32 = arith.constant 0 : i32
    %c0_i32_0 = arith.constant 0 : i32
    %c0_i32_1 = arith.constant 0 : i32
    return %c0_i32, %c0_i32_0 : i32, i32
  }
  func.func @transform_10(%arg0: i32) -> (i32, i32) {
    %c0_i32 = arith.constant 0 : i32
    %c0_i32_0 = arith.constant 0 : i32
    %c0_i32_1 = arith.constant 0 : i32
    return %c0_i32, %c0_i32_0 : i32, i32
  }
  func.func @transform_11(%arg0: i32) -> (i32, i32) {
    %c0_i32 = arith.constant 0 : i32
    %c0_i32_0 = arith.constant 0 : i32
    %c0_i32_1 = arith.constant 0 : i32
    return %c0_i32, %c0_i32_0 : i32, i32
  }
  func.func @transform_12(%arg0: i32) -> (i32, i32) {
    %c0_i32 = arith.constant 0 : i32
    %c0_i32_0 = arith.constant 0 : i32
    %c0_i32_1 = arith.constant 0 : i32
    return %c0_i32, %c0_i32_0 : i32, i32
  }
  func.func @transform_13(%arg0: i32) -> (i32, i32) {
    %c0_i32 = arith.constant 0 : i32
    %c0_i32_0 = arith.constant 0 : i32
    %c0_i32_1 = arith.constant 0 : i32
    return %c0_i32, %c0_i32_0 : i32, i32
  }
  func.func @transform_14(%arg0: i32) -> (i32, i32) {
    %c0_i32 = arith.constant 0 : i32
    %c0_i32_0 = arith.constant 0 : i32
    %c0_i32_1 = arith.constant 0 : i32
    return %c0_i32, %c0_i32_0 : i32, i32
  }
  func.func @transform_15(%arg0: i32) -> (i32, i32) {
    %c0_i32 = arith.constant 0 : i32
    %c0_i32_0 = arith.constant 0 : i32
    %c0_i32_1 = arith.constant 0 : i32
    return %c0_i32, %c0_i32_0 : i32, i32
  }
  func.func @transform_16(%arg0: i32) -> (i32, i32) {
    %c0_i32 = arith.constant 0 : i32
    %c0_i32_0 = arith.constant 0 : i32
    %c0_i32_1 = arith.constant 0 : i32
    return %c0_i32, %c0_i32_0 : i32, i32
  }
  func.func @transform_17(%arg0: i32) -> (i32, i32, i32) {
    %c0_i32 = arith.constant 0 : i32
    %c0_i32_0 = arith.constant 0 : i32
    %c0_i32_1 = arith.constant 0 : i32
    return %arg0, %c0_i32, %c0_i32_0 : i32, i32, i32
  }
}

</mosaic_0001>

<llo_original>
// kernel: tpu_custom_call.1
$region0: #{tpu_custom_call.1}
  #allocation0 [shape = 'u32[]', space=smem, size = 0x4, offset = 0x4, fixed_abs, tag = 'smem constant byte address 0x4 - core index']
  #allocation1 [shape = 'u32[144,128]{1,0:T(1,128)}', space=vmem, size = 0x12000, scoped, tag = 'internal scratch']
  #allocation2 [shape = 'f32[1,1]{1,0:T(1,128)S(1)}', space=vmem, size = 0x200, scoped, tag = 'scoped memory for tpu_custom_call.1']
  %s0 = inlined_call_operand.vmem [shape: f32[2,128,3], index: 0, kind: input, shape index: {}]
  %s1 = inlined_call_operand.vmem [shape: f32[2,8,16], index: 1, kind: input, shape index: {}]
  %s2 = inlined_call_operand.vmem [shape: f32[3,64], index: 2, kind: input, shape index: {}]
  %s3 = inlined_call_operand.vmem [shape: f32[1,64], index: 3, kind: input, shape index: {}]
  %s4 = inlined_call_operand.vmem [shape: f32[64,64], index: 4, kind: input, shape index: {}]
  %s5 = inlined_call_operand.vmem [shape: f32[1,64], index: 5, kind: input, shape index: {}]
  %s6 = inlined_call_operand.vmem [shape: f32[9,64], index: 6, kind: input, shape index: {}]
  %s7 = inlined_call_operand.vmem [shape: f32[1,64], index: 7, kind: input, shape index: {}]
  %s8 = inlined_call_operand.vmem [shape: f32[64,64], index: 8, kind: input, shape index: {}]
  %s9 = inlined_call_operand.vmem [shape: f32[1,64], index: 9, kind: input, shape index: {}]
  %s10 = inlined_call_operand.vmem [shape: f32[64,64], index: 10, kind: input, shape index: {}]
  %s11 = inlined_call_operand.vmem [shape: f32[64,64], index: 11, kind: input, shape index: {}]
  %s12 = inlined_call_operand.vmem [shape: f32[1,64], index: 12, kind: input, shape index: {}]
  %s13 = inlined_call_operand.vmem [shape: f32[64,32], index: 13, kind: input, shape index: {}]
  %s14 = inlined_call_operand.vmem [shape: f32[1,32], index: 14, kind: input, shape index: {}]
  %s15 = inlined_call_operand.vmem [shape: f32[1,32], index: 15, kind: input, shape index: {}]
  %s16 = inlined_call_operand.<no memory space> [shape: f32[1,1], index: 16, kind: input, shape index: {}]
  %s17 = inlined_call_operand.hbm [shape: f32[2,1,8], index: 17, kind: output, shape index: {}]
  %s18 = sld [smem:[#allocation0]]
  $region101: #{tpu_custom_call.1} parent=0
    _
  %s20 = ssub.s32 1, %s18
  %s21 = scalar_select 0, %s20, %s18
  %v22 = vstv %s16
  %23 = vst [vmem:[#allocation2] sm:$0x1] %v22
  $region1: #{tpu_custom_call.1} parent=0
    #allocation3 [shape = 'u8[1024]{0}', space=vmem, size = 0x400, scoped, tag = 'output window, operand 0']
    #allocation4 [shape = 's32[2]{0}', space=sflag, size = 0x8, scoped, tag = 'scoped memory for tpu_custom_call.1']
    %24 = vsyncpa [#allocation4], 0
    %s25 = scalar_lea.sflag [#allocation4], 1
    %26 = vsyncpa %s25, 0
    loop: start=0, step=1, limit=4
    $region2: #{tpu_custom_call.1} parent=1 // loop_pre_header
      _
    $region3: #{tpu_custom_call.1} parent=1 // loop_header
      %s28 = sphi 0, %s32
      %p29 = scmp.ge.s32.totalorder %s28, 4
      %s38 = sphi 0, %s40
      %s41 = sphi 0, %s38
      %s42 = sphi 0, %s41
      %s58 = sphi 0, %s42
      %s64 = sphi 0, %s66
      %s67 = sphi 0, %s64
      %s68 = sphi 0, %s67
      %s84 = sphi 0, %s68
      %s88 = sphi 0, %s88
      %s90 = sphi 0, %s88
      %s91 = sphi 0, %s90
      %s105 = sphi 0, %s91
      %s109 = sphi 0, %s109
      %s111 = sphi 0, %s109
      %s112 = sphi 0, %s111
      %s126 = sphi 0, %s112
      %s130 = sphi 0, %s130
      %s132 = sphi 0, %s130
      %s133 = sphi 0, %s132
      %s147 = sphi 0, %s133
      %s151 = sphi 0, %s151
      %s153 = sphi 0, %s151
      %s154 = sphi 0, %s153
      %s168 = sphi 0, %s154
      %s172 = sphi 0, %s172
      %s174 = sphi 0, %s172
      %s175 = sphi 0, %s174
      %s189 = sphi 0, %s175
      %s193 = sphi 0, %s193
      %s195 = sphi 0, %s193
      %s196 = sphi 0, %s195
      %s210 = sphi 0, %s196
      %s214 = sphi 0, %s214
      %s216 = sphi 0, %s214
      %s217 = sphi 0, %s216
      %s231 = sphi 0, %s217
      %s235 = sphi 0, %s235
      %s237 = sphi 0, %s235
      %s238 = sphi 0, %s237
      %s252 = sphi 0, %s238
      %s256 = sphi 0, %s256
      %s258 = sphi 0, %s256
      %s259 = sphi 0, %s258
      %s273 = sphi 0, %s259
      %s277 = sphi 0, %s277
      %s279 = sphi 0, %s277
      %s280 = sphi 0, %s279
      %s294 = sphi 0, %s280
      %s298 = sphi 0, %s298
      %s300 = sphi 0, %s298
      %s301 = sphi 0, %s300
      %s315 = sphi 0, %s301
      %s319 = sphi 0, %s319
      %s321 = sphi 0, %s319
      %s322 = sphi 0, %s321
      %s336 = sphi 0, %s322
      %s340 = sphi 0, %s340
      %s342 = sphi 0, %s340
      %s343 = sphi 0, %s342
      %s357 = sphi 0, %s343
      %s361 = sphi 0, %s361
      %s363 = sphi 0, %s361
      %s364 = sphi 0, %s363
      %s378 = sphi 0, %s364
      %s382 = sphi 0, %s382
      %s384 = sphi 0, %s382
      %s385 = sphi 0, %s384
      %s399 = sphi 0, %s385
      %s405 = sphi 0, %s407
      %s408 = sphi 0, %s405
      %s409 = sphi 0, %s408
      %s425 = sphi 0, %s409
    $region4: #{tpu_custom_call.1} parent=1 // loop_header_branch
      %31 = sbr.rel (%p29) target = $region8
    $region5: #{tpu_custom_call.1} parent=1 // loop_body
      %s33 = ssub.s32 %s28, 1
      %s34 = ssub.s32 %s28, 2
      %s35 = sadd.s32 %s28, 1
      %s36 = ssub.s32 %s28, %s35
      %p37 = scmp.eq.s32.totalorder %s36, 0
      %s39 = sadd.s32 %s38, 1
      %s40 = scalar_select %p37, %s38, %s39
      %p43 = pneg %p37
      %p44 = scmp.eq.s32.totalorder %s28, 1
      %p45 = por %p43, %p44
      %p46 = scmp.ne.s32.totalorder %s38, %s41
      %p47 = scmp.eq.s32.totalorder %s28, 0
      %p48 = por %p46, %p47
      %p49 = scmp.ne.s32.totalorder %s38, %s41
      %p50 = scmp.eq.s32.totalorder %s33, 1
      %p51 = por %p49, %p50
      %p52 = scmp.ne.s32.totalorder %s41, %s42
      %p53 = scmp.eq.s32.totalorder %s33, 0
      %p54 = por %p52, %p53
      %p55 = scmp.ne.s32.totalorder %s41, %s42
      %p56 = scmp.eq.s32.totalorder %s34, 1
      %p57 = por %p55, %p56
      %p59 = scmp.ne.s32.totalorder %s42, %s58
      %p60 = scmp.eq.s32.totalorder %s34, 0
      %p61 = por %p59, %p60
      %s62 = ssub.s32 %s28, %s35
      %p63 = scmp.eq.s32.totalorder %s62, 0
      %s65 = sadd.s32 %s64, 1
      %s66 = scalar_select %p63, %s64, %s65
      %p69 = pneg %p63
      %p70 = scmp.eq.s32.totalorder %s28, 1
      %p71 = por %p69, %p70
      %p72 = scmp.ne.s32.totalorder %s64, %s67
      %p73 = scmp.eq.s32.totalorder %s28, 0
      %p74 = por %p72, %p73
      %p75 = scmp.ne.s32.totalorder %s64, %s67
      %p76 = scmp.eq.s32.totalorder %s33, 1
      %p77 = por %p75, %p76
      %p78 = scmp.ne.s32.totalorder %s67, %s68
      %p79 = scmp.eq.s32.totalorder %s33, 0
      %p80 = por %p78, %p79
      %p81 = scmp.ne.s32.totalorder %s67, %s68
      %p82 = scmp.eq.s32.totalorder %s34, 1
      %p83 = por %p81, %p82
      %p85 = scmp.ne.s32.totalorder %s68, %s84
      %p86 = scmp.eq.s32.totalorder %s34, 0
      %p87 = por %p85, %p86
      %s89 = sadd.s32 %s88, 1
      %p92 = scmp.eq.s32.totalorder %s28, 1
      %p93 = scmp.ne.s32.totalorder %s88, %s90
      %p94 = scmp.eq.s32.totalorder %s28, 0
      %p95 = por %p93, %p94
      %p96 = scmp.ne.s32.totalorder %s88, %s90
      %p97 = scmp.eq.s32.totalorder %s33, 1
      %p98 = por %p96, %p97
      %p99 = scmp.ne.s32.totalorder %s90, %s91
      %p100 = scmp.eq.s32.totalorder %s33, 0
      %p101 = por %p99, %p100
      %p102 = scmp.ne.s32.totalorder %s90, %s91
      %p103 = scmp.eq.s32.totalorder %s34, 1
      %p104 = por %p102, %p103
      %p106 = scmp.ne.s32.totalorder %s91, %s105
      %p107 = scmp.eq.s32.totalorder %s34, 0
      %p108 = por %p106, %p107
      %s110 = sadd.s32 %s109, 1
      %p113 = scmp.eq.s32.totalorder %s28, 1
      %p114 = scmp.ne.s32.totalorder %s109, %s111
      %p115 = scmp.eq.s32.totalorder %s28, 0
      %p116 = por %p114, %p115
      %p117 = scmp.ne.s32.totalorder %s109, %s111
      %p118 = scmp.eq.s32.totalorder %s33, 1
      %p119 = por %p117, %p118
      %p120 = scmp.ne.s32.totalorder %s111, %s112
      %p121 = scmp.eq.s32.totalorder %s33, 0
      %p122 = por %p120, %p121
      %p123 = scmp.ne.s32.totalorder %s111, %s112
      %p124 = scmp.eq.s32.totalorder %s34, 1
      %p125 = por %p123, %p124
      %p127 = scmp.ne.s32.totalorder %s112, %s126
      %p128 = scmp.eq.s32.totalorder %s34, 0
      %p129 = por %p127, %p128
      %s131 = sadd.s32 %s130, 1
      %p134 = scmp.eq.s32.totalorder %s28, 1
      %p135 = scmp.ne.s32.totalorder %s130, %s132
      %p136 = scmp.eq.s32.totalorder %s28, 0
      %p137 = por %p135, %p136
      %p138 = scmp.ne.s32.totalorder %s130, %s132
      %p139 = scmp.eq.s32.totalorder %s33, 1
      %p140 = por %p138, %p139
      %p141 = scmp.ne.s32.totalorder %s132, %s133
      %p142 = scmp.eq.s32.totalorder %s33, 0
      %p143 = por %p141, %p142
      %p144 = scmp.ne.s32.totalorder %s132, %s133
      %p145 = scmp.eq.s32.totalorder %s34, 1
      %p146 = por %p144, %p145
      %p148 = scmp.ne.s32.totalorder %s133, %s147
      %p149 = scmp.eq.s32.totalorder %s34, 0
      %p150 = por %p148, %p149
      %s152 = sadd.s32 %s151, 1
      %p155 = scmp.eq.s32.totalorder %s28, 1
      %p156 = scmp.ne.s32.totalorder %s151, %s153
      %p157 = scmp.eq.s32.totalorder %s28, 0
      %p158 = por %p156, %p157
      %p159 = scmp.ne.s32.totalorder %s151, %s153
      %p160 = scmp.eq.s32.totalorder %s33, 1
      %p161 = por %p159, %p160
      %p162 = scmp.ne.s32.totalorder %s153, %s154
      %p163 = scmp.eq.s32.totalorder %s33, 0
      %p164 = por %p162, %p163
      %p165 = scmp.ne.s32.totalorder %s153, %s154
      %p166 = scmp.eq.s32.totalorder %s34, 1
      %p167 = por %p165, %p166
      %p169 = scmp.ne.s32.totalorder %s154, %s168
      %p170 = scmp.eq.s32.totalorder %s34, 0
      %p171 = por %p169, %p170
      %s173 = sadd.s32 %s172, 1
      %p176 = scmp.eq.s32.totalorder %s28, 1
      %p177 = scmp.ne.s32.totalorder %s172, %s174
      %p178 = scmp.eq.s32.totalorder %s28, 0
      %p179 = por %p177, %p178
      %p180 = scmp.ne.s32.totalorder %s172, %s174
      %p181 = scmp.eq.s32.totalorder %s33, 1
      %p182 = por %p180, %p181
      %p183 = scmp.ne.s32.totalorder %s174, %s175
      %p184 = scmp.eq.s32.totalorder %s33, 0
      %p185 = por %p183, %p184
      %p186 = scmp.ne.s32.totalorder %s174, %s175
      %p187 = scmp.eq.s32.totalorder %s34, 1
      %p188 = por %p186, %p187
      %p190 = scmp.ne.s32.totalorder %s175, %s189
      %p191 = scmp.eq.s32.totalorder %s34, 0
      %p192 = por %p190, %p191
      %s194 = sadd.s32 %s193, 1
      %p197 = scmp.eq.s32.totalorder %s28, 1
      %p198 = scmp.ne.s32.totalorder %s193, %s195
      %p199 = scmp.eq.s32.totalorder %s28, 0
      %p200 = por %p198, %p199
      %p201 = scmp.ne.s32.totalorder %s193, %s195
      %p202 = scmp.eq.s32.totalorder %s33, 1
      %p203 = por %p201, %p202
      %p204 = scmp.ne.s32.totalorder %s195, %s196
      %p205 = scmp.eq.s32.totalorder %s33, 0
      %p206 = por %p204, %p205
      %p207 = scmp.ne.s32.totalorder %s195, %s196
      %p208 = scmp.eq.s32.totalorder %s34, 1
      %p209 = por %p207, %p208
      %p211 = scmp.ne.s32.totalorder %s196, %s210
      %p212 = scmp.eq.s32.totalorder %s34, 0
      %p213 = por %p211, %p212
      %s215 = sadd.s32 %s214, 1
      %p218 = scmp.eq.s32.totalorder %s28, 1
      %p219 = scmp.ne.s32.totalorder %s214, %s216
      %p220 = scmp.eq.s32.totalorder %s28, 0
      %p221 = por %p219, %p220
      %p222 = scmp.ne.s32.totalorder %s214, %s216
      %p223 = scmp.eq.s32.totalorder %s33, 1
      %p224 = por %p222, %p223
      %p225 = scmp.ne.s32.totalorder %s216, %s217
      %p226 = scmp.eq.s32.totalorder %s33, 0
      %p227 = por %p225, %p226
      %p228 = scmp.ne.s32.totalorder %s216, %s217
      %p229 = scmp.eq.s32.totalorder %s34, 1
      %p230 = por %p228, %p229
      %p232 = scmp.ne.s32.totalorder %s217, %s231
      %p233 = scmp.eq.s32.totalorder %s34, 0
      %p234 = por %p232, %p233
      %s236 = sadd.s32 %s235, 1
      %p239 = scmp.eq.s32.totalorder %s28, 1
      %p240 = scmp.ne.s32.totalorder %s235, %s237
      %p241 = scmp.eq.s32.totalorder %s28, 0
      %p242 = por %p240, %p241
      %p243 = scmp.ne.s32.totalorder %s235, %s237
      %p244 = scmp.eq.s32.totalorder %s33, 1
      %p245 = por %p243, %p244
      %p246 = scmp.ne.s32.totalorder %s237, %s238
      %p247 = scmp.eq.s32.totalorder %s33, 0
      %p248 = por %p246, %p247
      %p249 = scmp.ne.s32.totalorder %s237, %s238
      %p250 = scmp.eq.s32.totalorder %s34, 1
      %p251 = por %p249, %p250
      %p253 = scmp.ne.s32.totalorder %s238, %s252
      %p254 = scmp.eq.s32.totalorder %s34, 0
      %p255 = por %p253, %p254
      %s257 = sadd.s32 %s256, 1
      %p260 = scmp.eq.s32.totalorder %s28, 1
      %p261 = scmp.ne.s32.totalorder %s256, %s258
      %p262 = scmp.eq.s32.totalorder %s28, 0
      %p263 = por %p261, %p262
      %p264 = scmp.ne.s32.totalorder %s256, %s258
      %p265 = scmp.eq.s32.totalorder %s33, 1
      %p266 = por %p264, %p265
      %p267 = scmp.ne.s32.totalorder %s258, %s259
      %p268 = scmp.eq.s32.totalorder %s33, 0
      %p269 = por %p267, %p268
      %p270 = scmp.ne.s32.totalorder %s258, %s259
      %p271 = scmp.eq.s32.totalorder %s34, 1
      %p272 = por %p270, %p271
      %p274 = scmp.ne.s32.totalorder %s259, %s273
      %p275 = scmp.eq.s32.totalorder %s34, 0
      %p276 = por %p274, %p275
      %s278 = sadd.s32 %s277, 1
      %p281 = scmp.eq.s32.totalorder %s28, 1
      %p282 = scmp.ne.s32.totalorder %s277, %s279
      %p283 = scmp.eq.s32.totalorder %s28, 0
      %p284 = por %p282, %p283
      %p285 = scmp.ne.s32.totalorder %s277, %s279
      %p286 = scmp.eq.s32.totalorder %s33, 1
      %p287 = por %p285, %p286
      %p288 = scmp.ne.s32.totalorder %s279, %s280
      %p289 = scmp.eq.s32.totalorder %s33, 0
      %p290 = por %p288, %p289
      %p291 = scmp.ne.s32.totalorder %s279, %s280
      %p292 = scmp.eq.s32.totalorder %s34, 1
      %p293 = por %p291, %p292
      %p295 = scmp.ne.s32.totalorder %s280, %s294
      %p296 = scmp.eq.s32.totalorder %s34, 0
      %p297 = por %p295, %p296
      %s299 = sadd.s32 %s298, 1
      %p302 = scmp.eq.s32.totalorder %s28, 1
      %p303 = scmp.ne.s32.totalorder %s298, %s300
      %p304 = scmp.eq.s32.totalorder %s28, 0
      %p305 = por %p303, %p304
      %p306 = scmp.ne.s32.totalorder %s298, %s300
      %p307 = scmp.eq.s32.totalorder %s33, 1
      %p308 = por %p306, %p307
      %p309 = scmp.ne.s32.totalorder %s300, %s301
      %p310 = scmp.eq.s32.totalorder %s33, 0
      %p311 = por %p309, %p310
      %p312 = scmp.ne.s32.totalorder %s300, %s301
      %p313 = scmp.eq.s32.totalorder %s34, 1
      %p314 = por %p312, %p313
      %p316 = scmp.ne.s32.totalorder %s301, %s315
      %p317 = scmp.eq.s32.totalorder %s34, 0
      %p318 = por %p316, %p317
      %s320 = sadd.s32 %s319, 1
      %p323 = scmp.eq.s32.totalorder %s28, 1
      %p324 = scmp.ne.s32.totalorder %s319, %s321
      %p325 = scmp.eq.s32.totalorder %s28, 0
      %p326 = por %p324, %p325
      %p327 = scmp.ne.s32.totalorder %s319, %s321
      %p328 = scmp.eq.s32.totalorder %s33, 1
      %p329 = por %p327, %p328
      %p330 = scmp.ne.s32.totalorder %s321, %s322
      %p331 = scmp.eq.s32.totalorder %s33, 0
      %p332 = por %p330, %p331
      %p333 = scmp.ne.s32.totalorder %s321, %s322
      %p334 = scmp.eq.s32.totalorder %s34, 1
      %p335 = por %p333, %p334
      %p337 = scmp.ne.s32.totalorder %s322, %s336
      %p338 = scmp.eq.s32.totalorder %s34, 0
      %p339 = por %p337, %p338
      %s341 = sadd.s32 %s340, 1
      %p344 = scmp.eq.s32.totalorder %s28, 1
      %p345 = scmp.ne.s32.totalorder %s340, %s342
      %p346 = scmp.eq.s32.totalorder %s28, 0
      %p347 = por %p345, %p346
      %p348 = scmp.ne.s32.totalorder %s340, %s342
      %p349 = scmp.eq.s32.totalorder %s33, 1
      %p350 = por %p348, %p349
      %p351 = scmp.ne.s32.totalorder %s342, %s343
      %p352 = scmp.eq.s32.totalorder %s33, 0
      %p353 = por %p351, %p352
      %p354 = scmp.ne.s32.totalorder %s342, %s343
      %p355 = scmp.eq.s32.totalorder %s34, 1
      %p356 = por %p354, %p355
      %p358 = scmp.ne.s32.totalorder %s343, %s357
      %p359 = scmp.eq.s32.totalorder %s34, 0
      %p360 = por %p358, %p359
      %s362 = sadd.s32 %s361, 1
      %p365 = scmp.eq.s32.totalorder %s28, 1
      %p366 = scmp.ne.s32.totalorder %s361, %s363
      %p367 = scmp.eq.s32.totalorder %s28, 0
      %p368 = por %p366, %p367
      %p369 = scmp.ne.s32.totalorder %s361, %s363
      %p370 = scmp.eq.s32.totalorder %s33, 1
      %p371 = por %p369, %p370
      %p372 = scmp.ne.s32.totalorder %s363, %s364
      %p373 = scmp.eq.s32.totalorder %s33, 0
      %p374 = por %p372, %p373
      %p375 = scmp.ne.s32.totalorder %s363, %s364
      %p376 = scmp.eq.s32.totalorder %s34, 1
      %p377 = por %p375, %p376
      %p379 = scmp.ne.s32.totalorder %s364, %s378
      %p380 = scmp.eq.s32.totalorder %s34, 0
      %p381 = por %p379, %p380
      %s383 = sadd.s32 %s382, 1
      %p386 = scmp.eq.s32.totalorder %s28, 1
      %p387 = scmp.ne.s32.totalorder %s382, %s384
      %p388 = scmp.eq.s32.totalorder %s28, 0
      %p389 = por %p387, %p388
      %p390 = scmp.ne.s32.totalorder %s382, %s384
      %p391 = scmp.eq.s32.totalorder %s33, 1
      %p392 = por %p390, %p391
      %p393 = scmp.ne.s32.totalorder %s384, %s385
      %p394 = scmp.eq.s32.totalorder %s33, 0
      %p395 = por %p393, %p394
      %p396 = scmp.ne.s32.totalorder %s384, %s385
      %p397 = scmp.eq.s32.totalorder %s34, 1
      %p398 = por %p396, %p397
      %p400 = scmp.ne.s32.totalorder %s385, %s399
      %p401 = scmp.eq.s32.totalorder %s34, 0
      %p402 = por %p400, %p401
      %s403 = ssub.s32 %s28, %s35
      %p404 = scmp.eq.s32.totalorder %s403, 0
      %s406 = sadd.s32 %s405, 1
      %s407 = scalar_select %p404, %s405, %s406
      %p410 = pneg %p404
      %p411 = scmp.eq.s32.totalorder %s28, 1
      %p412 = por %p410, %p411
      %p413 = scmp.ne.s32.totalorder %s405, %s408
      %p414 = scmp.eq.s32.totalorder %s28, 0
      %p415 = por %p413, %p414
      %p416 = scmp.ne.s32.totalorder %s405, %s408
      %p417 = scmp.eq.s32.totalorder %s33, 1
      %p418 = por %p416, %p417
      %p419 = scmp.ne.s32.totalorder %s408, %s409
      %p420 = scmp.eq.s32.totalorder %s33, 0
      %p421 = por %p419, %p420
      %p422 = scmp.ne.s32.totalorder %s408, %s409
      %p423 = scmp.eq.s32.totalorder %s34, 1
      %p424 = por %p422, %p423
      %p426 = scmp.ne.s32.totalorder %s409, %s425
      %p427 = scmp.eq.s32.totalorder %s34, 0
      %p428 = por %p426, %p427
      %p429 = scmp.le.s32.totalorder 1, %s28
      %p430 = scmp.lt.s32.totalorder %s28, 3
      %p431 = pnand %p429, %p430
      %p432 = pneg %p431
      // Predicated region
      $region9: #{tpu_custom_call.1} parent=5 // pred_check
        _
      $region10: #{tpu_custom_call.1} parent=5 // pred_check_branch
        %434 = sbr.rel (%p431) target = $region12
      $region11: #{tpu_custom_call.1} parent=5 // pred_region
        %s435 = ssub.s32 %s28, 1
        // Predicated region
        $region13: #{tpu_custom_call.1} parent=11 // pred_check
          %p436 = pneg %p101
        $region14: #{tpu_custom_call.1} parent=11 // pred_check_branch
          %438 = sbr.rel (%p436) target = $region16
        $region15: #{tpu_custom_call.1} parent=11 // pred_region
          _
        $region16: #{tpu_custom_call.1} parent=11 // pred_fallthru
          _
        // Predicated region
        $region17: #{tpu_custom_call.1} parent=11 // pred_check
          %p439 = pneg %p122
        $region18: #{tpu_custom_call.1} parent=11 // pred_check_branch
          %441 = sbr.rel (%p439) target = $region20
        $region19: #{tpu_custom_call.1} parent=11 // pred_region
          _
        $region20: #{tpu_custom_call.1} parent=11 // pred_fallthru
          _
        // Predicated region
        $region21: #{tpu_custom_call.1} parent=11 // pred_check
          %p442 = pneg %p143
        $region22: #{tpu_custom_call.1} parent=11 // pred_check_branch
          %444 = sbr.rel (%p442) target = $region24
        $region23: #{tpu_custom_call.1} parent=11 // pred_region
          _
        $region24: #{tpu_custom_call.1} parent=11 // pred_fallthru
          _
        // Predicated region
        $region25: #{tpu_custom_call.1} parent=11 // pred_check
          %p445 = pneg %p164
        $region26: #{tpu_custom_call.1} parent=11 // pred_check_branch
          %447 = sbr.rel (%p445) target = $region28
        $region27: #{tpu_custom_call.1} parent=11 // pred_region
          _
        $region28: #{tpu_custom_call.1} parent=11 // pred_fallthru
          _
        // Predicated region
        $region29: #{tpu_custom_call.1} parent=11 // pred_check
          %p448 = pneg %p185
        $region30: #{tpu_custom_call.1} parent=11 // pred_check_branch
          %450 = sbr.rel (%p448) target = $region32
        $region31: #{tpu_custom_call.1} parent=11 // pred_region
          _
        $region32: #{tpu_custom_call.1} parent=11 // pred_fallthru
          _
        // Predicated region
        $region33: #{tpu_custom_call.1} parent=11 // pred_check
          %p451 = pneg %p206
        $region34: #{tpu_custom_call.1} parent=11 // pred_check_branch
          %453 = sbr.rel (%p451) target = $region36
        $region35: #{tpu_custom_call.1} parent=11 // pred_region
          _
        $region36: #{tpu_custom_call.1} parent=11 // pred_fallthru
          _
        // Predicated region
        $region37: #{tpu_custom_call.1} parent=11 // pred_check
          %p454 = pneg %p227
        $region38: #{tpu_custom_call.1} parent=11 // pred_check_branch
          %456 = sbr.rel (%p454) target = $region40
        $region39: #{tpu_custom_call.1} parent=11 // pred_region
          _
        $region40: #{tpu_custom_call.1} parent=11 // pred_fallthru
          _
        // Predicated region
        $region41: #{tpu_custom_call.1} parent=11 // pred_check
          %p457 = pneg %p248
        $region42: #{tpu_custom_call.1} parent=11 // pred_check_branch
          %459 = sbr.rel (%p457) target = $region44
        $region43: #{tpu_custom_call.1} parent=11 // pred_region
          _
        $region44: #{tpu_custom_call.1} parent=11 // pred_fallthru
          _
        // Predicated region
        $region45: #{tpu_custom_call.1} parent=11 // pred_check
          %p460 = pneg %p269
        $region46: #{tpu_custom_call.1} parent=11 // pred_check_branch
          %462 = sbr.rel (%p460) target = $region48
        $region47: #{tpu_custom_call.1} parent=11 // pred_region
          _
        $region48: #{tpu_custom_call.1} parent=11 // pred_fallthru
          _
        // Predicated region
        $region49: #{tpu_custom_call.1} parent=11 // pred_check
          %p463 = pneg %p290
        $region50: #{tpu_custom_call.1} parent=11 // pred_check_branch
          %465 = sbr.rel (%p463) target = $region52
        $region51: #{tpu_custom_call.1} parent=11 // pred_region
          _
        $region52: #{tpu_custom_call.1} parent=11 // pred_fallthru
          _
        // Predicated region
        $region53: #{tpu_custom_call.1} parent=11 // pred_check
          %p466 = pneg %p311
        $region54: #{tpu_custom_call.1} parent=11 // pred_check_branch
          %468 = sbr.rel (%p466) target = $region56
        $region55: #{tpu_custom_call.1} parent=11 // pred_region
          _
        $region56: #{tpu_custom_call.1} parent=11 // pred_fallthru
          _
        // Predicated region
        $region57: #{tpu_custom_call.1} parent=11 // pred_check
          %p469 = pneg %p332
        $region58: #{tpu_custom_call.1} parent=11 // pred_check_branch
          %471 = sbr.rel (%p469) target = $region60
        $region59: #{tpu_custom_call.1} parent=11 // pred_region
          _
        $region60: #{tpu_custom_call.1} parent=11 // pred_fallthru
          _
        // Predicated region
        $region61: #{tpu_custom_call.1} parent=11 // pred_check
          %p472 = pneg %p353
        $region62: #{tpu_custom_call.1} parent=11 // pred_check_branch
          %474 = sbr.rel (%p472) target = $region64
        $region63: #{tpu_custom_call.1} parent=11 // pred_region
          _
        $region64: #{tpu_custom_call.1} parent=11 // pred_fallthru
          _
        // Predicated region
        $region65: #{tpu_custom_call.1} parent=11 // pred_check
          %p475 = pneg %p374
        $region66: #{tpu_custom_call.1} parent=11 // pred_check_branch
          %477 = sbr.rel (%p475) target = $region68
        $region67: #{tpu_custom_call.1} parent=11 // pred_region
          _
        $region68: #{tpu_custom_call.1} parent=11 // pred_fallthru
          _
        // Predicated region
        $region69: #{tpu_custom_call.1} parent=11 // pred_check
          %p478 = pneg %p395
        $region70: #{tpu_custom_call.1} parent=11 // pred_check_branch
          %480 = sbr.rel (%p478) target = $region72
        $region71: #{tpu_custom_call.1} parent=11 // pred_region
          _
        $region72: #{tpu_custom_call.1} parent=11 // pred_fallthru
          _
      $region12: #{tpu_custom_call.1} parent=5 // pred_fallthru
        _
      %p481 = scmp.lt.s32.totalorder %s28, 2
      // Predicated region
      $region73: #{tpu_custom_call.1} parent=5 // pred_check
        %p482 = pneg %p481
      $region74: #{tpu_custom_call.1} parent=5 // pred_check_branch
        %484 = sbr.rel (%p482) target = $region76
      $region75: #{tpu_custom_call.1} parent=5 // pred_region
        // Predicated region
        $region77: #{tpu_custom_call.1} parent=75 // pred_check
          %p485 = pneg %p48
        $region78: #{tpu_custom_call.1} parent=75 // pred_check_branch
          %487 = sbr.rel (%p485) target = $region80
        $region79: #{tpu_custom_call.1} parent=75 // pred_region
          %p488 = scmp.lt.s32.totalorder %s28, 1
          %s489 = scalar_select %p488, %s28, 1
          %s490 = smul.addr %s489, 16
          %s491 = smul.addr %s490, 8
          %s492 = scalar_lea.vmem %s0, %s491
        $region80: #{tpu_custom_call.1} parent=75 // pred_fallthru
          _
        // Predicated region
        $region81: #{tpu_custom_call.1} parent=75 // pred_check
          %p493 = pneg %p74
        $region82: #{tpu_custom_call.1} parent=75 // pred_check_branch
          %495 = sbr.rel (%p493) target = $region84
        $region83: #{tpu_custom_call.1} parent=75 // pred_region
          %p496 = scmp.lt.s32.totalorder %s28, 1
          %s497 = scalar_select %p496, %s28, 1
          %s498 = smul.addr %s497, 8
          %s499 = scalar_lea.vmem %s1, %s498
        $region84: #{tpu_custom_call.1} parent=75 // pred_fallthru
          _
      $region76: #{tpu_custom_call.1} parent=5 // pred_fallthru
        _
      %p500 = scmp.le.s32.totalorder 1, %s28
      %p501 = scmp.lt.s32.totalorder %s28, 3
      %p502 = pnand %p500, %p501
      %p503 = pneg %p502
      // Predicated region
      $region85: #{tpu_custom_call.1} parent=5 // pred_check
        _
      $region86: #{tpu_custom_call.1} parent=5 // pred_check_branch
        %505 = sbr.rel (%p502) target = $region88
      $region87: #{tpu_custom_call.1} parent=5 // pred_region
        %s506 = ssub.s32 %s28, 1
        %p507 = scmp.lt.s32.totalorder %s33, 1
        %s508 = scalar_select %p507, %s33, 1
        %s509 = smul.addr %s508, 16
        %s510 = smul.addr %s509, 8
        %s511 = scalar_lea.vmem %s0, %s510
        %p512 = pneg %p54
        %p513 = pneg %p51
        %p514 = scmp.lt.s32.totalorder %s33, 1
        %s515 = scalar_select %p514, %s33, 1
        %s516 = smul.addr %s515, 8
        %s517 = scalar_lea.vmem %s1, %s516
        %p518 = pneg %p80
        %p519 = pneg %p77
        %p520 = pneg %p101
        %p521 = pneg %p98
        %p522 = pneg %p122
        %p523 = pneg %p119
        %p524 = pneg %p143
        %p525 = pneg %p140
        %p526 = pneg %p164
        %p527 = pneg %p161
        %p528 = pneg %p185
        %p529 = pneg %p182
        %p530 = pneg %p206
        %p531 = pneg %p203
        %p532 = pneg %p227
        %p533 = pneg %p224
        %p534 = pneg %p248
        %p535 = pneg %p245
        %p536 = pneg %p269
        %p537 = pneg %p266
        %p538 = pneg %p290
        %p539 = pneg %p287
        %p540 = pneg %p311
        %p541 = pneg %p308
        %p542 = pneg %p332
        %p543 = pneg %p329
        %p544 = pneg %p353
        %p545 = pneg %p350
        %p546 = pneg %p374
        %p547 = pneg %p371
        %p548 = pneg %p395
        %p549 = pneg %p392
        %p550 = pneg %p421
        %p551 = pneg %p418
        %s552 = sand.u32 %s408, 1
        %s553 = scalar_lea.sflag [#allocation4], %s552
        %s554 = sand.u32 %s408, 1
        %s555 = scalar_lea.vmem [#allocation3], %s554
        %p556 = scmp.lt.s32.totalorder %s33, 1
        %s557 = scalar_select %p556, %s33, 1
        %s558 = smul.addr %s557, 16
        %s559 = smul.addr %s558, 8
        %s560 = scalar_lea.vmem %s0, %s559
        %p561 = scmp.lt.s32.totalorder %s33, 1
        %s562 = scalar_select %p561, %s33, 1
        %s563 = smul.addr %s562, 8
        %s564 = scalar_lea.vmem %s1, %s563
        %v565 = vld [vmem:[%s560] sm:$0xff]
        %v566 = vld [vmem:[%s560 + $0x8] sm:$0xff]
        %v567 = vld [vmem:[%s560 + $0x10] sm:$0xff]
        %v568 = vld [vmem:[%s560 + $0x18] sm:$0xff]
        %v569 = vld [vmem:[%s560 + $0x20] sm:$0xff]
        %v570 = vld [vmem:[%s560 + $0x28] sm:$0xff]
        %v571 = vld [vmem:[%s560 + $0x30] sm:$0xff]
        %v572 = vld [vmem:[%s560 + $0x38] sm:$0xff]
        %v573 = vld [vmem:[%s560 + $0x40] sm:$0xff]
        %v574 = vld [vmem:[%s560 + $0x48] sm:$0xff]
        %v575 = vld [vmem:[%s560 + $0x50] sm:$0xff]
        %v576 = vld [vmem:[%s560 + $0x58] sm:$0xff]
        %v577 = vld [vmem:[%s560 + $0x60] sm:$0xff]
        %v578 = vld [vmem:[%s560 + $0x68] sm:$0xff]
        %v579 = vld [vmem:[%s560 + $0x70] sm:$0xff]
        %v580 = vld [vmem:[%s560 + $0x78] sm:$0xff]
        %v581 = vmul.f32 %v565, 3.3
        %v582 = vmul.f32 %v566, 3.3
        %v583 = vmul.f32 %v567, 3.3
        %v584 = vmul.f32 %v568, 3.3
        %v585 = vmul.f32 %v569, 3.3
        %v586 = vmul.f32 %v570, 3.3
        %v587 = vmul.f32 %v571, 3.3
        %v588 = vmul.f32 %v572, 3.3
        %v589 = vmul.f32 %v573, 3.3
        %v590 = vmul.f32 %v574, 3.3
        %v591 = vmul.f32 %v575, 3.3
        %v592 = vmul.f32 %v576, 3.3
        %v593 = vmul.f32 %v577, 3.3
        %v594 = vmul.f32 %v578, 3.3
        %v595 = vmul.f32 %v579, 3.3
        %v596 = vmul.f32 %v580, 3.3
        %v597 = vld [vmem:[%s2] sm:$0x1]
        %599 = vset.pattern.permute.xlu0 0
        %600 = vperm.xlu0 %599, %v581
        %v601 = vpop.permute.xlu0 %600
        %604 = vset.pattern.permute.xlu0 0
        %605 = vperm.xlu0 %604, %v582
        %v606 = vpop.permute.xlu0 %605
        %609 = vset.pattern.permute.xlu0 0
        %610 = vperm.xlu0 %609, %v583
        %v611 = vpop.permute.xlu0 %610
        %614 = vset.pattern.permute.xlu0 0
        %615 = vperm.xlu0 %614, %v584
        %v616 = vpop.permute.xlu0 %615
        %619 = vset.pattern.permute.xlu0 0
        %620 = vperm.xlu0 %619, %v585
        %v621 = vpop.permute.xlu0 %620
        %624 = vset.pattern.permute.xlu0 0
        %625 = vperm.xlu0 %624, %v586
        %v626 = vpop.permute.xlu0 %625
        %629 = vset.pattern.permute.xlu0 0
        %630 = vperm.xlu0 %629, %v587
        %v631 = vpop.permute.xlu0 %630
        %634 = vset.pattern.permute.xlu0 0
        %635 = vperm.xlu0 %634, %v588
        %v636 = vpop.permute.xlu0 %635
        %639 = vset.pattern.permute.xlu0 0
        %640 = vperm.xlu0 %639, %v589
        %v641 = vpop.permute.xlu0 %640
        %644 = vset.pattern.permute.xlu0 0
        %645 = vperm.xlu0 %644, %v590
        %v646 = vpop.permute.xlu0 %645
        %649 = vset.pattern.permute.xlu0 0
        %650 = vperm.xlu0 %649, %v591
        %v651 = vpop.permute.xlu0 %650
        %654 = vset.pattern.permute.xlu0 0
        %655 = vperm.xlu0 %654, %v592
        %v656 = vpop.permute.xlu0 %655
        %659 = vset.pattern.permute.xlu0 0
        %660 = vperm.xlu0 %659, %v593
        %v661 = vpop.permute.xlu0 %660
        %664 = vset.pattern.permute.xlu0 0
        %665 = vperm.xlu0 %664, %v594
        %v666 = vpop.permute.xlu0 %665
        %669 = vset.pattern.permute.xlu0 0
        %670 = vperm.xlu0 %669, %v595
        %v671 = vpop.permute.xlu0 %670
        %674 = vset.pattern.permute.xlu0 0
        %675 = vperm.xlu0 %674, %v596
        %v676 = vpop.permute.xlu0 %675
        %v678 = vlaneseq
        %v679 = vshrl.u32 %v678, 7
        %v680 = vsub.s32 0, %v679
        %v681 = vrot.slane %v597, %v680
        %v682 = vmul.f32 %v601, %v681
        %v683 = vmul.f32 %v606, %v681
        %v684 = vmul.f32 %v611, %v681
        %v685 = vmul.f32 %v616, %v681
        %v686 = vmul.f32 %v621, %v681
        %v687 = vmul.f32 %v626, %v681
        %v688 = vmul.f32 %v631, %v681
        %v689 = vmul.f32 %v636, %v681
        %v690 = vmul.f32 %v641, %v681
        %v691 = vmul.f32 %v646, %v681
        %v692 = vmul.f32 %v651, %v681
        %v693 = vmul.f32 %v656, %v681
        %v694 = vmul.f32 %v661, %v681
        %v695 = vmul.f32 %v666, %v681
        %v696 = vmul.f32 %v671, %v681
        %v697 = vmul.f32 %v676, %v681
        %v698 = vld [vmem:[%s2 + $0x1] sm:$0x1]
        %699 = vset.pattern.permute.xlu0 1
        %700 = vperm.xlu0 %699, %v581
        %v701 = vpop.permute.xlu0 %700
        %703 = vset.pattern.permute.xlu0 1
        %704 = vperm.xlu0 %703, %v582
        %v705 = vpop.permute.xlu0 %704
        %707 = vset.pattern.permute.xlu0 1
        %708 = vperm.xlu0 %707, %v583
        %v709 = vpop.permute.xlu0 %708
        %711 = vset.pattern.permute.xlu0 1
        %712 = vperm.xlu0 %711, %v584
        %v713 = vpop.permute.xlu0 %712
        %715 = vset.pattern.permute.xlu0 1
        %716 = vperm.xlu0 %715, %v585
        %v717 = vpop.permute.xlu0 %716
        %719 = vset.pattern.permute.xlu0 1
        %720 = vperm.xlu0 %719, %v586
        %v721 = vpop.permute.xlu0 %720
        %723 = vset.pattern.permute.xlu0 1
        %724 = vperm.xlu0 %723, %v587
        %v725 = vpop.permute.xlu0 %724
        %727 = vset.pattern.permute.xlu0 1
        %728 = vperm.xlu0 %727, %v588
        %v729 = vpop.permute.xlu0 %728
        %731 = vset.pattern.permute.xlu0 1
        %732 = vperm.xlu0 %731, %v589
        %v733 = vpop.permute.xlu0 %732
        %735 = vset.pattern.permute.xlu0 1
        %736 = vperm.xlu0 %735, %v590
        %v737 = vpop.permute.xlu0 %736
        %739 = vset.pattern.permute.xlu0 1
        %740 = vperm.xlu0 %739, %v591
        %v741 = vpop.permute.xlu0 %740
        %743 = vset.pattern.permute.xlu0 1
        %744 = vperm.xlu0 %743, %v592
        %v745 = vpop.permute.xlu0 %744
        %747 = vset.pattern.permute.xlu0 1
        %748 = vperm.xlu0 %747, %v593
        %v749 = vpop.permute.xlu0 %748
        %751 = vset.pattern.permute.xlu0 1
        %752 = vperm.xlu0 %751, %v594
        %v753 = vpop.permute.xlu0 %752
        %755 = vset.pattern.permute.xlu0 1
        %756 = vperm.xlu0 %755, %v595
        %v757 = vpop.permute.xlu0 %756
        %759 = vset.pattern.permute.xlu0 1
        %760 = vperm.xlu0 %759, %v596
        %v761 = vpop.permute.xlu0 %760
        %v763 = vlaneseq
        %v764 = vshrl.u32 %v763, 7
        %v765 = vsub.s32 0, %v764
        %v766 = vrot.slane %v698, %v765
        %v767 = vmul.f32 %v701, %v766
        %v768 = vmul.f32 %v705, %v766
        %v769 = vmul.f32 %v709, %v766
        %v770 = vmul.f32 %v713, %v766
        %v771 = vmul.f32 %v717, %v766
        %v772 = vmul.f32 %v721, %v766
        %v773 = vmul.f32 %v725, %v766
        %v774 = vmul.f32 %v729, %v766
        %v775 = vmul.f32 %v733, %v766
        %v776 = vmul.f32 %v737, %v766
        %v777 = vmul.f32 %v741, %v766
        %v778 = vmul.f32 %v745, %v766
        %v779 = vmul.f32 %v749, %v766
        %v780 = vmul.f32 %v753, %v766
        %v781 = vmul.f32 %v757, %v766
        %v782 = vmul.f32 %v761, %v766
        %v783 = vadd.f32 %v682, %v767
        %v784 = vadd.f32 %v683, %v768
        %v785 = vadd.f32 %v684, %v769
        %v786 = vadd.f32 %v685, %v770
        %v787 = vadd.f32 %v686, %v771
        %v788 = vadd.f32 %v687, %v772
        %v789 = vadd.f32 %v688, %v773
        %v790 = vadd.f32 %v689, %v774
        %v791 = vadd.f32 %v690, %v775
        %v792 = vadd.f32 %v691, %v776
        %v793 = vadd.f32 %v692, %v777
        %v794 = vadd.f32 %v693, %v778
        %v795 = vadd.f32 %v694, %v779
        %v796 = vadd.f32 %v695, %v780
        %v797 = vadd.f32 %v696, %v781
        %v798 = vadd.f32 %v697, %v782
        %v799 = vld [vmem:[%s2 + $0x2] sm:$0x1]
        %800 = vset.pattern.permute.xlu0 2
        %801 = vperm.xlu0 %800, %v581
        %v802 = vpop.permute.xlu0 %801
        %804 = vset.pattern.permute.xlu0 2
        %805 = vperm.xlu0 %804, %v582
        %v806 = vpop.permute.xlu0 %805
        %808 = vset.pattern.permute.xlu0 2
        %809 = vperm.xlu0 %808, %v583
        %v810 = vpop.permute.xlu0 %809
        %812 = vset.pattern.permute.xlu0 2
        %813 = vperm.xlu0 %812, %v584
        %v814 = vpop.permute.xlu0 %813
        %816 = vset.pattern.permute.xlu0 2
        %817 = vperm.xlu0 %816, %v585
        %v818 = vpop.permute.xlu0 %817
        %820 = vset.pattern.permute.xlu0 2
        %821 = vperm.xlu0 %820, %v586
        %v822 = vpop.permute.xlu0 %821
        %824 = vset.pattern.permute.xlu0 2
        %825 = vperm.xlu0 %824, %v587
        %v826 = vpop.permute.xlu0 %825
        %828 = vset.pattern.permute.xlu0 2
        %829 = vperm.xlu0 %828, %v588
        %v830 = vpop.permute.xlu0 %829
        %832 = vset.pattern.permute.xlu0 2
        %833 = vperm.xlu0 %832, %v589
        %v834 = vpop.permute.xlu0 %833
        %836 = vset.pattern.permute.xlu0 2
        %837 = vperm.xlu0 %836, %v590
        %v838 = vpop.permute.xlu0 %837
        %840 = vset.pattern.permute.xlu0 2
        %841 = vperm.xlu0 %840, %v591
        %v842 = vpop.permute.xlu0 %841
        %844 = vset.pattern.permute.xlu0 2
        %845 = vperm.xlu0 %844, %v592
        %v846 = vpop.permute.xlu0 %845
        %848 = vset.pattern.permute.xlu0 2
        %849 = vperm.xlu0 %848, %v593
        %v850 = vpop.permute.xlu0 %849
        %852 = vset.pattern.permute.xlu0 2
        %853 = vperm.xlu0 %852, %v594
        %v854 = vpop.permute.xlu0 %853
        %856 = vset.pattern.permute.xlu0 2
        %857 = vperm.xlu0 %856, %v595
        %v858 = vpop.permute.xlu0 %857
        %860 = vset.pattern.permute.xlu0 2
        %861 = vperm.xlu0 %860, %v596
        %v862 = vpop.permute.xlu0 %861
        %v864 = vlaneseq
        %v865 = vshrl.u32 %v864, 7
        %v866 = vsub.s32 0, %v865
        %v867 = vrot.slane %v799, %v866
        %v868 = vmul.f32 %v802, %v867
        %v869 = vmul.f32 %v806, %v867
        %v870 = vmul.f32 %v810, %v867
        %v871 = vmul.f32 %v814, %v867
        %v872 = vmul.f32 %v818, %v867
        %v873 = vmul.f32 %v822, %v867
        %v874 = vmul.f32 %v826, %v867
        %v875 = vmul.f32 %v830, %v867
        %v876 = vmul.f32 %v834, %v867
        %v877 = vmul.f32 %v838, %v867
        %v878 = vmul.f32 %v842, %v867
        %v879 = vmul.f32 %v846, %v867
        %v880 = vmul.f32 %v850, %v867
        %v881 = vmul.f32 %v854, %v867
        %v882 = vmul.f32 %v858, %v867
        %v883 = vmul.f32 %v862, %v867
        %v884 = vadd.f32 %v783, %v868
        %v885 = vadd.f32 %v784, %v869
        %v886 = vadd.f32 %v785, %v870
        %v887 = vadd.f32 %v786, %v871
        %v888 = vadd.f32 %v787, %v872
        %v889 = vadd.f32 %v788, %v873
        %v890 = vadd.f32 %v789, %v874
        %v891 = vadd.f32 %v790, %v875
        %v892 = vadd.f32 %v791, %v876
        %v893 = vadd.f32 %v792, %v877
        %v894 = vadd.f32 %v793, %v878
        %v895 = vadd.f32 %v794, %v879
        %v896 = vadd.f32 %v795, %v880
        %v897 = vadd.f32 %v796, %v881
        %v898 = vadd.f32 %v797, %v882
        %v899 = vadd.f32 %v798, %v883
        %v900 = vld [vmem:[%s3] sm:$0x1]
        %v902 = vlaneseq
        %v903 = vshrl.u32 %v902, 7
        %v904 = vsub.s32 0, %v903
        %v905 = vrot.slane %v900, %v904
        %v907 = vadd.f32 %v884, %v905
        %v908 = vadd.f32 %v885, %v905
        %v909 = vadd.f32 %v886, %v905
        %v910 = vadd.f32 %v887, %v905
        %v911 = vadd.f32 %v888, %v905
        %v912 = vadd.f32 %v889, %v905
        %v913 = vadd.f32 %v890, %v905
        %v914 = vadd.f32 %v891, %v905
        %v915 = vadd.f32 %v892, %v905
        %v916 = vadd.f32 %v893, %v905
        %v917 = vadd.f32 %v894, %v905
        %v918 = vadd.f32 %v895, %v905
        %v919 = vadd.f32 %v896, %v905
        %v920 = vadd.f32 %v897, %v905
        %v921 = vadd.f32 %v898, %v905
        %v922 = vadd.f32 %v899, %v905
        %v923 = vmax.f32 %v907, 0.0
        %v924 = vmax.f32 %v908, 0.0
        %v925 = vmax.f32 %v909, 0.0
        %v926 = vmax.f32 %v910, 0.0
        %v927 = vmax.f32 %v911, 0.0
        %v928 = vmax.f32 %v912, 0.0
        %v929 = vmax.f32 %v913, 0.0
        %v930 = vmax.f32 %v914, 0.0
        %v931 = vmax.f32 %v915, 0.0
        %v932 = vmax.f32 %v916, 0.0
        %v933 = vmax.f32 %v917, 0.0
        %v934 = vmax.f32 %v918, 0.0
        %v935 = vmax.f32 %v919, 0.0
        %v936 = vmax.f32 %v920, 0.0
        %v937 = vmax.f32 %v921, 0.0
        %v938 = vmax.f32 %v922, 0.0
        %v939 = vld [vmem:[%s4] sm:$0xff]
        %v940 = vld [vmem:[%s4 + $0x8] sm:$0xff]
        %v941 = vld [vmem:[%s4 + $0x10] sm:$0xff]
        %v942 = vld [vmem:[%s4 + $0x18] sm:$0xff]
        %v943 = vld [vmem:[%s4 + $0x20] sm:$0xff]
        %v944 = vld [vmem:[%s4 + $0x28] sm:$0xff]
        %v945 = vld [vmem:[%s4 + $0x30] sm:$0xff]
        %v946 = vld [vmem:[%s4 + $0x38] sm:$0xff]
        %vm947 = vcmask 523264
        %v949 = vsel %vm947, %v923, 0
        %v952 = vsel %vm947, %v924, 0
        %v955 = vsel %vm947, %v925, 0
        %v958 = vsel %vm947, %v926, 0
        %v961 = vsel %vm947, %v927, 0
        %v964 = vsel %vm947, %v928, 0
        %v967 = vsel %vm947, %v929, 0
        %v970 = vsel %vm947, %v930, 0
        %v973 = vsel %vm947, %v931, 0
        %v976 = vsel %vm947, %v932, 0
        %v979 = vsel %vm947, %v933, 0
        %v982 = vsel %vm947, %v934, 0
        %v985 = vsel %vm947, %v935, 0
        %v988 = vsel %vm947, %v936, 0
        %v991 = vsel %vm947, %v937, 0
        %v994 = vsel %vm947, %v938, 0
        %996 = vmatprep.subr.mxu0 0.0
        %997 = vmatpush1.msra.mxu0 %v939
        %998 = vmatprep.subr.mxu0 0.0
        %999 = vmatpush1.msra.mxu0 %v940
        %1000 = vmatprep.subr.mxu0 0.0
        %1001 = vmatpush1.msra.mxu0 %v941
        %1002 = vmatprep.subr.mxu0 0.0
        %1003 = vmatpush1.msra.mxu0 %v942
        %1004 = vmatprep.subr.mxu0 0.0
        %1005 = vmatpush1.msra.mxu0 %v943
        %1006 = vmatprep.subr.mxu0 0.0
        %1007 = vmatpush1.msra.mxu0 %v944
        %1008 = vmatprep.subr.mxu0 0.0
        %1009 = vmatpush1.msra.mxu0 %v945
        %1010 = vmatprep.subr.mxu0 0.0
        %1011 = vmatpush1.msra.mxu0 %v946
        %1012 = vmatprep.subr.mxu0 0.0
        %1013 = vmatpush1.msra.mxu0 0.0
        %1014 = vmatprep.subr.mxu0 0.0
        %1015 = vmatpush1.msra.mxu0 0.0
        %1016 = vmatprep.subr.mxu0 0.0
        %1017 = vmatpush1.msra.mxu0 0.0
        %1018 = vmatprep.subr.mxu0 0.0
        %1019 = vmatpush1.msra.mxu0 0.0
        %1020 = vmatprep.subr.mxu0 0.0
        %1021 = vmatpush1.msra.mxu0 0.0
        %1022 = vmatprep.subr.mxu0 0.0
        %1023 = vmatpush1.msra.mxu0 0.0
        %1024 = vmatprep.subr.mxu0 0.0
        %1025 = vmatpush1.msra.mxu0 0.0
        %1026 = vmatprep.subr.mxu0 0.0
        %1027 = vmatpush1.msra.mxu0 0.0
        %1028 = vmatprep.subr.mxu0 0.0
        %1029 = vmatpush1.msra.mxu0 0.0
        %1030 = vmatprep.subr.mxu0 0.0
        %1031 = vmatpush1.msra.mxu0 0.0
        %1032 = vmatprep.subr.mxu0 0.0
        %1033 = vmatpush1.msra.mxu0 0.0
        %1034 = vmatprep.subr.mxu0 0.0
        %1035 = vmatpush1.msra.mxu0 0.0
        %1036 = vmatprep.subr.mxu0 0.0
        %1037 = vmatpush1.msra.mxu0 0.0
        %1038 = vmatprep.subr.mxu0 0.0
        %1039 = vmatpush1.msra.mxu0 0.0
        %1040 = vmatprep.subr.mxu0 0.0
        %1041 = vmatpush1.msra.mxu0 0.0
        %1042 = vmatprep.subr.mxu0 0.0
        %1043 = vmatpush1.msra.mxu0 0.0
        %1044 = vmatprep.subr.mxu0 0.0
        %1045 = vmatpush1.msra.mxu0 0.0
        %1046 = vmatprep.subr.mxu0 0.0
        %1047 = vmatpush1.msra.mxu0 0.0
        %1048 = vmatprep.subr.mxu0 0.0
        %1049 = vmatpush1.msra.mxu0 0.0
        %1050 = vmatprep.subr.mxu0 0.0
        %1051 = vmatpush1.msra.mxu0 0.0
        %1052 = vmatprep.subr.mxu0 0.0
        %1053 = vmatpush1.msra.mxu0 0.0
        %1054 = vmatprep.subr.mxu0 0.0
        %1055 = vmatpush1.msra.mxu0 0.0
        %1056 = vmatprep.subr.mxu0 0.0
        %1057 = vmatpush1.msra.mxu0 0.0
        %1058 = vmatprep.subr.mxu0 0.0
        %1059 = vmatpush1.msra.mxu0 0.0
        %1060 = vmatprep.mubr.f32.mxu0 0.0
        %1061 = vmatmul.mubr.f32.gmra.mrb[0].mxu0 %v949
        %v1062 = vpop.f32.mrb[0].mxu0
        %v1063 = vadd.f32 0.0, %v1062
        %v1064 = vpop.f32.mrb[0].mxu0
        %1065 = vmatprep.mubr.f32.mxu0 0.0
        %1066 = vmatmul.mubr.f32.gmra.mrb[0].mxu0 %v952
        %v1067 = vpop.f32.mrb[0].mxu0
        %v1068 = vadd.f32 0.0, %v1067
        %v1069 = vpop.f32.mrb[0].mxu0
        %1070 = vmatprep.mubr.f32.mxu0 0.0
        %1071 = vmatmul.mubr.f32.gmra.mrb[0].mxu0 %v955
        %v1072 = vpop.f32.mrb[0].mxu0
        %v1073 = vadd.f32 0.0, %v1072
        %v1074 = vpop.f32.mrb[0].mxu0
        %1075 = vmatprep.mubr.f32.mxu0 0.0
        %1076 = vmatmul.mubr.f32.gmra.mrb[0].mxu0 %v958
        %v1077 = vpop.f32.mrb[0].mxu0
        %v1078 = vadd.f32 0.0, %v1077
        %v1079 = vpop.f32.mrb[0].mxu0
        %1080 = vmatprep.mubr.f32.mxu0 0.0
        %1081 = vmatmul.mubr.f32.gmra.mrb[0].mxu0 %v961
        %v1082 = vpop.f32.mrb[0].mxu0
        %v1083 = vadd.f32 0.0, %v1082
        %v1084 = vpop.f32.mrb[0].mxu0
        %1085 = vmatprep.mubr.f32.mxu0 0.0
        %1086 = vmatmul.mubr.f32.gmra.mrb[0].mxu0 %v964
        %v1087 = vpop.f32.mrb[0].mxu0
        %v1088 = vadd.f32 0.0, %v1087
        %v1089 = vpop.f32.mrb[0].mxu0
        %1090 = vmatprep.mubr.f32.mxu0 0.0
        %1091 = vmatmul.mubr.f32.gmra.mrb[0].mxu0 %v967
        %v1092 = vpop.f32.mrb[0].mxu0
        %v1093 = vadd.f32 0.0, %v1092
        %v1094 = vpop.f32.mrb[0].mxu0
        %1095 = vmatprep.mubr.f32.mxu0 0.0
        %1096 = vmatmul.mubr.f32.gmra.mrb[0].mxu0 %v970
        %v1097 = vpop.f32.mrb[0].mxu0
        %v1098 = vadd.f32 0.0, %v1097
        %v1099 = vpop.f32.mrb[0].mxu0
        %1100 = vmatprep.mubr.f32.mxu0 0.0
        %1101 = vmatmul.mubr.f32.gmra.mrb[0].mxu0 %v973
        %v1102 = vpop.f32.mrb[0].mxu0
        %v1103 = vadd.f32 0.0, %v1102
        %v1104 = vpop.f32.mrb[0].mxu0
        %1105 = vmatprep.mubr.f32.mxu0 0.0
        %1106 = vmatmul.mubr.f32.gmra.mrb[0].mxu0 %v976
        %v1107 = vpop.f32.mrb[0].mxu0
        %v1108 = vadd.f32 0.0, %v1107
        %v1109 = vpop.f32.mrb[0].mxu0
        %1110 = vmatprep.mubr.f32.mxu0 0.0
        %1111 = vmatmul.mubr.f32.gmra.mrb[0].mxu0 %v979
        %v1112 = vpop.f32.mrb[0].mxu0
        %v1113 = vadd.f32 0.0, %v1112
        %v1114 = vpop.f32.mrb[0].mxu0
        %1115 = vmatprep.mubr.f32.mxu0 0.0
        %1116 = vmatmul.mubr.f32.gmra.mrb[0].mxu0 %v982
        %v1117 = vpop.f32.mrb[0].mxu0
        %v1118 = vadd.f32 0.0, %v1117
        %v1119 = vpop.f32.mrb[0].mxu0
        %1120 = vmatprep.mubr.f32.mxu0 0.0
        %1121 = vmatmul.mubr.f32.gmra.mrb[0].mxu0 %v985
        %v1122 = vpop.f32.mrb[0].mxu0
        %v1123 = vadd.f32 0.0, %v1122
        %v1124 = vpop.f32.mrb[0].mxu0
        %1125 = vmatprep.mubr.f32.mxu0 0.0
        %1126 = vmatmul.mubr.f32.gmra.mrb[0].mxu0 %v988
        %v1127 = vpop.f32.mrb[0].mxu0
        %v1128 = vadd.f32 0.0, %v1127
        %v1129 = vpop.f32.mrb[0].mxu0
        %1130 = vmatprep.mubr.f32.mxu0 0.0
        %1131 = vmatmul.mubr.f32.gmra.mrb[0].mxu0 %v991
        %v1132 = vpop.f32.mrb[0].mxu0
        %v1133 = vadd.f32 0.0, %v1132
        %v1134 = vpop.f32.mrb[0].mxu0
        %1135 = vmatprep.mubr.f32.mxu0 0.0
        %1136 = vmatmul.mubr.f32.gmra.mrb[0].mxu0 %v994
        %v1137 = vpop.f32.mrb[0].mxu0
        %v1138 = vadd.f32 0.0, %v1137
        %v1139 = vpop.f32.mrb[0].mxu0
        %1140 = vdwg.mxu0
        %v1141 = vsel %vm947, %v1063, -inf
        %v1142 = vsel %vm947, %v1068, -inf
        %v1143 = vsel %vm947, %v1073, -inf
        %v1144 = vsel %vm947, %v1078, -inf
        %v1145 = vsel %vm947, %v1083, -inf
        %v1146 = vmax.f32 %v1141, %v1145
        %v1147 = vsel %vm947, %v1088, -inf
        %v1148 = vmax.f32 %v1142, %v1147
        %v1149 = vsel %vm947, %v1093, -inf
        %v1150 = vmax.f32 %v1143, %v1149
        %v1151 = vsel %vm947, %v1098, -inf
        %v1152 = vmax.f32 %v1144, %v1151
        %v1153 = vsel %vm947, %v1103, -inf
        %v1154 = vmax.f32 %v1146, %v1153
        %v1155 = vsel %vm947, %v1108, -inf
        %v1156 = vmax.f32 %v1148, %v1155
        %v1157 = vsel %vm947, %v1113, -inf
        %v1158 = vmax.f32 %v1150, %v1157
        %v1159 = vsel %vm947, %v1118, -inf
        %v1160 = vmax.f32 %v1152, %v1159
        %v1161 = vsel %vm947, %v1123, -inf
        %v1162 = vmax.f32 %v1154, %v1161
        %v1163 = vsel %vm947, %v1128, -inf
        %v1164 = vmax.f32 %v1156, %v1163
        %v1165 = vsel %vm947, %v1133, -inf
        %v1166 = vmax.f32 %v1158, %v1165
        %v1167 = vsel %vm947, %v1138, -inf
        %v1168 = vmax.f32 %v1160, %v1167
        %v1169 = vmax.f32 %v1162, %v1164
        %v1170 = vmax.f32 %v1166, %v1168
        %v1171 = vmax.f32 %v1169, %v1170
        %v1172 = vrot.slane %v1171, 4
        %v1173 = vmax.f32 %v1171, %v1172
        %v1174 = vrot.slane %v1173, 2
        %v1175 = vmax.f32 %v1173, %v1174
        %v1176 = vrot.slane %v1175, 1
        %v1177 = vmax.f32 %v1175, %v1176
        %v1178 = vld [vmem:[%s5] sm:$0x1]
        %v1179 = vadd.f32 %v1177, %v1178
        %v1180 = vld [vmem:[%s564] sm:$0xff]
        %v1181 = vld [vmem:[%s7] sm:$0x1]
        %v1182 = vmul.f32 %v1180, 3.3
        %v1183 = vld [vmem:[%s6] sm:$0x1]
        %1185 = vset.pattern.permute.xlu0 3
        %1186 = vperm.xlu0 %1185, %v1182
        %v1187 = vpop.permute.xlu0 %1186
        %v1189 = vlaneseq
        %v1190 = vshrl.u32 %v1189, 7
        %v1191 = vsub.s32 0, %v1190
        %v1192 = vrot.slane %v1183, %v1191
        %v1193 = vmul.f32 %v1187, %v1192
        %v1195 = vlaneseq
        %v1196 = vshrl.u32 %v1195, 7
        %v1197 = vsub.s32 0, %v1196
        %v1198 = vrot.slane %v1181, %v1197
        %v1200 = vadd.f32 %v1198, %v1193
        %v1201 = vld [vmem:[%s6 + $0x1] sm:$0x1]
        %1202 = vset.pattern.permute.xlu0 7
        %1203 = vperm.xlu0 %1202, %v1182
        %v1204 = vpop.permute.xlu0 %1203
        %v1206 = vlaneseq
        %v1207 = vshrl.u32 %v1206, 7
        %v1208 = vsub.s32 0, %v1207
        %v1209 = vrot.slane %v1201, %v1208
        %v1210 = vmul.f32 %v1204, %v1209
        %v1211 = vadd.f32 %v1200, %v1210
        %v1212 = vld [vmem:[%s6 + $0x2] sm:$0x1]
        %1213 = vset.pattern.permute.xlu0 11
        %1214 = vperm.xlu0 %1213, %v1182
        %v1215 = vpop.permute.xlu0 %1214
        %v1217 = vlaneseq
        %v1218 = vshrl.u32 %v1217, 7
        %v1219 = vsub.s32 0, %v1218
        %v1220 = vrot.slane %v1212, %v1219
        %v1221 = vmul.f32 %v1215, %v1220
        %v1222 = vadd.f32 %v1211, %v1221
        %v1223 = vld [vmem:[%s6 + $0x3] sm:$0x1]
        %1225 = vset.pattern.permute.xlu0 0
        %1226 = vperm.xlu0 %1225, %v1180
        %v1227 = vpop.permute.xlu0 %1226
        %v1229 = vlaneseq
        %v1230 = vshrl.u32 %v1229, 7
        %v1231 = vsub.s32 0, %v1230
        %v1232 = vrot.slane %v1223, %v1231
        %v1233 = vmul.f32 %v1227, %v1232
        %v1234 = vadd.f32 %v1222, %v1233
        %v1235 = vld [vmem:[%s6 + $0x4] sm:$0x1]
        %1236 = vset.pattern.permute.xlu0 4
        %1237 = vperm.xlu0 %1236, %v1180
        %v1238 = vpop.permute.xlu0 %1237
        %v1240 = vlaneseq
        %v1241 = vshrl.u32 %v1240, 7
        %v1242 = vsub.s32 0, %v1241
        %v1243 = vrot.slane %v1235, %v1242
        %v1244 = vmul.f32 %v1238, %v1243
        %v1245 = vadd.f32 %v1234, %v1244
        %v1246 = vld [vmem:[%s6 + $0x5] sm:$0x1]
        %1247 = vset.pattern.permute.xlu0 8
        %1248 = vperm.xlu0 %1247, %v1180
        %v1249 = vpop.permute.xlu0 %1248
        %v1251 = vlaneseq
        %v1252 = vshrl.u32 %v1251, 7
        %v1253 = vsub.s32 0, %v1252
        %v1254 = vrot.slane %v1246, %v1253
        %v1255 = vmul.f32 %v1249, %v1254
        %v1256 = vadd.f32 %v1245, %v1255
        %v1257 = vld [vmem:[%s6 + $0x6] sm:$0x1]
        %1258 = vset.pattern.permute.xlu0 1
        %1259 = vperm.xlu0 %1258, %v1180
        %v1260 = vpop.permute.xlu0 %1259
        %v1262 = vlaneseq
        %v1263 = vshrl.u32 %v1262, 7
        %v1264 = vsub.s32 0, %v1263
        %v1265 = vrot.slane %v1257, %v1264
        %v1266 = vmul.f32 %v1260, %v1265
        %v1267 = vadd.f32 %v1256, %v1266
        %v1268 = vld [vmem:[%s6 + $0x7] sm:$0x1]
        %1269 = vset.pattern.permute.xlu0 5
        %1270 = vperm.xlu0 %1269, %v1180
        %v1271 = vpop.permute.xlu0 %1270
        %v1273 = vlaneseq
        %v1274 = vshrl.u32 %v1273, 7
        %v1275 = vsub.s32 0, %v1274
        %v1276 = vrot.slane %v1268, %v1275
        %v1277 = vmul.f32 %v1271, %v1276
        %v1278 = vadd.f32 %v1267, %v1277
        %v1279 = vld [vmem:[%s6 + $0x8] sm:$0x1]
        %1280 = vset.pattern.permute.xlu0 9
        %1281 = vperm.xlu0 %1280, %v1180
        %v1282 = vpop.permute.xlu0 %1281
        %v1284 = vlaneseq
        %v1285 = vshrl.u32 %v1284, 7
        %v1286 = vsub.s32 0, %v1285
        %v1287 = vrot.slane %v1279, %v1286
        %v1288 = vmul.f32 %v1282, %v1287
        %v1289 = vadd.f32 %v1278, %v1288
        %v1290 = vmax.f32 %v1289, 0.0
        %v1291 = vld [vmem:[%s8] sm:$0xff]
        %v1292 = vld [vmem:[%s8 + $0x8] sm:$0xff]
        %v1293 = vld [vmem:[%s8 + $0x10] sm:$0xff]
        %v1294 = vld [vmem:[%s8 + $0x18] sm:$0xff]
        %v1295 = vld [vmem:[%s8 + $0x20] sm:$0xff]
        %v1296 = vld [vmem:[%s8 + $0x28] sm:$0xff]
        %v1297 = vld [vmem:[%s8 + $0x30] sm:$0xff]
        %v1298 = vld [vmem:[%s8 + $0x38] sm:$0xff]
        %v1299 = vld [vmem:[%s9] sm:$0x1]
        %v1301 = vlaneseq
        %v1302 = vshrl.u32 %v1301, 7
        %v1303 = vsub.s32 0, %v1302
        %v1304 = vrot.slane %v1299, %v1303
        %v1307 = vsel %vm947, %v1290, 0
        %1309 = vmatprep.subr.mxu0 0.0
        %1310 = vmatpush1.msra.mxu0 %v1291
        %1311 = vmatprep.subr.mxu0 0.0
        %1312 = vmatpush1.msra.mxu0 %v1292
        %1313 = vmatprep.subr.mxu0 0.0
        %1314 = vmatpush1.msra.mxu0 %v1293
        %1315 = vmatprep.subr.mxu0 0.0
        %1316 = vmatpush1.msra.mxu0 %v1294
        %1317 = vmatprep.subr.mxu0 0.0
        %1318 = vmatpush1.msra.mxu0 %v1295
        %1319 = vmatprep.subr.mxu0 0.0
        %1320 = vmatpush1.msra.mxu0 %v1296
        %1321 = vmatprep.subr.mxu0 0.0
        %1322 = vmatpush1.msra.mxu0 %v1297
        %1323 = vmatprep.subr.mxu0 0.0
        %1324 = vmatpush1.msra.mxu0 %v1298
        %1325 = vmatprep.subr.mxu0 0.0
        %1326 = vmatpush1.msra.mxu0 0.0
        %1327 = vmatprep.subr.mxu0 0.0
        %1328 = vmatpush1.msra.mxu0 0.0
        %1329 = vmatprep.subr.mxu0 0.0
        %1330 = vmatpush1.msra.mxu0 0.0
        %1331 = vmatprep.subr.mxu0 0.0
        %1332 = vmatpush1.msra.mxu0 0.0
        %1333 = vmatprep.subr.mxu0 0.0
        %1334 = vmatpush1.msra.mxu0 0.0
        %1335 = vmatprep.subr.mxu0 0.0
        %1336 = vmatpush1.msra.mxu0 0.0
        %1337 = vmatprep.subr.mxu0 0.0
        %1338 = vmatpush1.msra.mxu0 0.0
        %1339 = vmatprep.subr.mxu0 0.0
        %1340 = vmatpush1.msra.mxu0 0.0
        %1341 = vmatprep.subr.mxu0 0.0
        %1342 = vmatpush1.msra.mxu0 0.0
        %1343 = vmatprep.subr.mxu0 0.0
        %1344 = vmatpush1.msra.mxu0 0.0
        %1345 = vmatprep.subr.mxu0 0.0
        %1346 = vmatpush1.msra.mxu0 0.0
        %1347 = vmatprep.subr.mxu0 0.0
        %1348 = vmatpush1.msra.mxu0 0.0
        %1349 = vmatprep.subr.mxu0 0.0
        %1350 = vmatpush1.msra.mxu0 0.0
        %1351 = vmatprep.subr.mxu0 0.0
        %1352 = vmatpush1.msra.mxu0 0.0
        %1353 = vmatprep.subr.mxu0 0.0
        %1354 = vmatpush1.msra.mxu0 0.0
        %1355 = vmatprep.subr.mxu0 0.0
        %1356 = vmatpush1.msra.mxu0 0.0
        %1357 = vmatprep.subr.mxu0 0.0
        %1358 = vmatpush1.msra.mxu0 0.0
        %1359 = vmatprep.subr.mxu0 0.0
        %1360 = vmatpush1.msra.mxu0 0.0
        %1361 = vmatprep.subr.mxu0 0.0
        %1362 = vmatpush1.msra.mxu0 0.0
        %1363 = vmatprep.subr.mxu0 0.0
        %1364 = vmatpush1.msra.mxu0 0.0
        %1365 = vmatprep.subr.mxu0 0.0
        %1366 = vmatpush1.msra.mxu0 0.0
        %1367 = vmatprep.subr.mxu0 0.0
        %1368 = vmatpush1.msra.mxu0 0.0
        %1369 = vmatprep.subr.mxu0 0.0
        %1370 = vmatpush1.msra.mxu0 0.0
        %1371 = vmatprep.subr.mxu0 0.0
        %1372 = vmatpush1.msra.mxu0 0.0
        %1373 = vmatprep.mubr.f32.mxu0 0.0
        %1374 = vmatmul.mubr.f32.gmra.mrb[0].mxu0 %v1307
        %v1375 = vpop.f32.mrb[0].mxu0
        %v1376 = vadd.f32 %v1304, %v1375
        %v1377 = vpop.f32.mrb[0].mxu0
        %1378 = vdwg.mxu0
        %v1379 = vld [vmem:[%s10] sm:$0xff]
        %v1380 = vld [vmem:[%s10 + $0x8] sm:$0xff]
        %v1381 = vld [vmem:[%s10 + $0x10] sm:$0xff]
        %v1382 = vld [vmem:[%s10 + $0x18] sm:$0xff]
        %v1383 = vld [vmem:[%s10 + $0x20] sm:$0xff]
        %v1384 = vld [vmem:[%s10 + $0x28] sm:$0xff]
        %v1385 = vld [vmem:[%s10 + $0x30] sm:$0xff]
        %v1386 = vld [vmem:[%s10 + $0x38] sm:$0xff]
        %v1387 = vld [vmem:[%s11] sm:$0xff]
        %v1388 = vld [vmem:[%s11 + $0x8] sm:$0xff]
        %v1389 = vld [vmem:[%s11 + $0x10] sm:$0xff]
        %v1390 = vld [vmem:[%s11 + $0x18] sm:$0xff]
        %v1391 = vld [vmem:[%s11 + $0x20] sm:$0xff]
        %v1392 = vld [vmem:[%s11 + $0x28] sm:$0xff]
        %v1393 = vld [vmem:[%s11 + $0x30] sm:$0xff]
        %v1394 = vld [vmem:[%s11 + $0x38] sm:$0xff]
        %v1396 = vsel %vm947, %v1179, 0
        %1398 = vmatprep.subr.mxu0 0.0
        %1399 = vmatpush1.msra.mxu0 %v1387
        %1400 = vmatprep.subr.mxu0 0.0
        %1401 = vmatpush1.msra.mxu0 %v1388
        %1402 = vmatprep.subr.mxu0 0.0
        %1403 = vmatpush1.msra.mxu0 %v1389
        %1404 = vmatprep.subr.mxu0 0.0
        %1405 = vmatpush1.msra.mxu0 %v1390
        %1406 = vmatprep.subr.mxu0 0.0
        %1407 = vmatpush1.msra.mxu0 %v1391
        %1408 = vmatprep.subr.mxu0 0.0
        %1409 = vmatpush1.msra.mxu0 %v1392
        %1410 = vmatprep.subr.mxu0 0.0
        %1411 = vmatpush1.msra.mxu0 %v1393
        %1412 = vmatprep.subr.mxu0 0.0
        %1413 = vmatpush1.msra.mxu0 %v1394
        %1414 = vmatprep.subr.mxu0 0.0
        %1415 = vmatpush1.msra.mxu0 0.0
        %1416 = vmatprep.subr.mxu0 0.0
        %1417 = vmatpush1.msra.mxu0 0.0
        %1418 = vmatprep.subr.mxu0 0.0
        %1419 = vmatpush1.msra.mxu0 0.0
        %1420 = vmatprep.subr.mxu0 0.0
        %1421 = vmatpush1.msra.mxu0 0.0
        %1422 = vmatprep.subr.mxu0 0.0
        %1423 = vmatpush1.msra.mxu0 0.0
        %1424 = vmatprep.subr.mxu0 0.0
        %1425 = vmatpush1.msra.mxu0 0.0
        %1426 = vmatprep.subr.mxu0 0.0
        %1427 = vmatpush1.msra.mxu0 0.0
        %1428 = vmatprep.subr.mxu0 0.0
        %1429 = vmatpush1.msra.mxu0 0.0
        %1430 = vmatprep.subr.mxu0 0.0
        %1431 = vmatpush1.msra.mxu0 0.0
        %1432 = vmatprep.subr.mxu0 0.0
        %1433 = vmatpush1.msra.mxu0 0.0
        %1434 = vmatprep.subr.mxu0 0.0
        %1435 = vmatpush1.msra.mxu0 0.0
        %1436 = vmatprep.subr.mxu0 0.0
        %1437 = vmatpush1.msra.mxu0 0.0
        %1438 = vmatprep.subr.mxu0 0.0
        %1439 = vmatpush1.msra.mxu0 0.0
        %1440 = vmatprep.subr.mxu0 0.0
        %1441 = vmatpush1.msra.mxu0 0.0
        %1442 = vmatprep.subr.mxu0 0.0
        %1443 = vmatpush1.msra.mxu0 0.0
        %1444 = vmatprep.subr.mxu0 0.0
        %1445 = vmatpush1.msra.mxu0 0.0
        %1446 = vmatprep.subr.mxu0 0.0
        %1447 = vmatpush1.msra.mxu0 0.0
        %1448 = vmatprep.subr.mxu0 0.0
        %1449 = vmatpush1.msra.mxu0 0.0
        %1450 = vmatprep.subr.mxu0 0.0
        %1451 = vmatpush1.msra.mxu0 0.0
        %1452 = vmatprep.subr.mxu0 0.0
        %1453 = vmatpush1.msra.mxu0 0.0
        %1454 = vmatprep.subr.mxu0 0.0
        %1455 = vmatpush1.msra.mxu0 0.0
        %1456 = vmatprep.subr.mxu0 0.0
        %1457 = vmatpush1.msra.mxu0 0.0
        %1458 = vmatprep.subr.mxu0 0.0
        %1459 = vmatpush1.msra.mxu0 0.0
        %1460 = vmatprep.subr.mxu0 0.0
        %1461 = vmatpush1.msra.mxu0 0.0
        %1462 = vmatprep.mubr.f32.mxu0 0.0
        %1463 = vmatmul.mubr.f32.gmra.mrb[0].mxu0 %v1396
        %v1464 = vpop.f32.mrb[0].mxu0
        %v1465 = vadd.f32 0.0, %v1464
        %v1466 = vpop.f32.mrb[0].mxu0
        %1467 = vdwg.mxu0
        %v1468 = vlaneseq
        %v1469 = vshrl.u32 %v1468, 7
        %v1470 = vsub.s32 0, %v1469
        %v1471 = vrot.slane %v1465, %v1470
        %v1473 = vsel %vm947, %v1376, 0
        %1475 = vmatprep.subr.mxu0 0.0
        %1476 = vmatpush1.msra.mxu0 %v1379
        %1477 = vmatprep.subr.mxu0 0.0
        %1478 = vmatpush1.msra.mxu0 %v1380
        %1479 = vmatprep.subr.mxu0 0.0
        %1480 = vmatpush1.msra.mxu0 %v1381
        %1481 = vmatprep.subr.mxu0 0.0
        %1482 = vmatpush1.msra.mxu0 %v1382
        %1483 = vmatprep.subr.mxu0 0.0
        %1484 = vmatpush1.msra.mxu0 %v1383
        %1485 = vmatprep.subr.mxu0 0.0
        %1486 = vmatpush1.msra.mxu0 %v1384
        %1487 = vmatprep.subr.mxu0 0.0
        %1488 = vmatpush1.msra.mxu0 %v1385
        %1489 = vmatprep.subr.mxu0 0.0
        %1490 = vmatpush1.msra.mxu0 %v1386
        %1491 = vmatprep.subr.mxu0 0.0
        %1492 = vmatpush1.msra.mxu0 0.0
        %1493 = vmatprep.subr.mxu0 0.0
        %1494 = vmatpush1.msra.mxu0 0.0
        %1495 = vmatprep.subr.mxu0 0.0
        %1496 = vmatpush1.msra.mxu0 0.0
        %1497 = vmatprep.subr.mxu0 0.0
        %1498 = vmatpush1.msra.mxu0 0.0
        %1499 = vmatprep.subr.mxu0 0.0
        %1500 = vmatpush1.msra.mxu0 0.0
        %1501 = vmatprep.subr.mxu0 0.0
        %1502 = vmatpush1.msra.mxu0 0.0
        %1503 = vmatprep.subr.mxu0 0.0
        %1504 = vmatpush1.msra.mxu0 0.0
        %1505 = vmatprep.subr.mxu0 0.0
        %1506 = vmatpush1.msra.mxu0 0.0
        %1507 = vmatprep.subr.mxu0 0.0
        %1508 = vmatpush1.msra.mxu0 0.0
        %1509 = vmatprep.subr.mxu0 0.0
        %1510 = vmatpush1.msra.mxu0 0.0
        %1511 = vmatprep.subr.mxu0 0.0
        %1512 = vmatpush1.msra.mxu0 0.0
        %1513 = vmatprep.subr.mxu0 0.0
        %1514 = vmatpush1.msra.mxu0 0.0
        %1515 = vmatprep.subr.mxu0 0.0
        %1516 = vmatpush1.msra.mxu0 0.0
        %1517 = vmatprep.subr.mxu0 0.0
        %1518 = vmatpush1.msra.mxu0 0.0
        %1519 = vmatprep.subr.mxu0 0.0
        %1520 = vmatpush1.msra.mxu0 0.0
        %1521 = vmatprep.subr.mxu0 0.0
        %1522 = vmatpush1.msra.mxu0 0.0
        %1523 = vmatprep.subr.mxu0 0.0
        %1524 = vmatpush1.msra.mxu0 0.0
        %1525 = vmatprep.subr.mxu0 0.0
        %1526 = vmatpush1.msra.mxu0 0.0
        %1527 = vmatprep.subr.mxu0 0.0
        %1528 = vmatpush1.msra.mxu0 0.0
        %1529 = vmatprep.subr.mxu0 0.0
        %1530 = vmatpush1.msra.mxu0 0.0
        %1531 = vmatprep.subr.mxu0 0.0
        %1532 = vmatpush1.msra.mxu0 0.0
        %1533 = vmatprep.subr.mxu0 0.0
        %1534 = vmatpush1.msra.mxu0 0.0
        %1535 = vmatprep.subr.mxu0 0.0
        %1536 = vmatpush1.msra.mxu0 0.0
        %1537 = vmatprep.subr.mxu0 0.0
        %1538 = vmatpush1.msra.mxu0 0.0
        %1539 = vmatprep.mubr.f32.mxu0 0.0
        %1540 = vmatmul.mubr.f32.gmra.mrb[0].mxu0 %v1473
        %v1541 = vpop.f32.mrb[0].mxu0
        %v1542 = vadd.f32 %v1471, %v1541
        %v1543 = vpop.f32.mrb[0].mxu0
        %1544 = vdwg.mxu0
        %v1545 = vld [vmem:[%s12] sm:$0x1]
        %v1547 = vlaneseq
        %v1548 = vshrl.u32 %v1547, 7
        %v1549 = vsub.s32 0, %v1548
        %v1550 = vrot.slane %v1545, %v1549
        %v1552 = vadd.f32 %v1542, %v1550
        %v1553 = vmax.f32 %v1552, 0.0
        %v1554 = vld [vmem:[%s13] sm:$0xff]
        %v1555 = vld [vmem:[%s13 + $0x8] sm:$0xff]
        %v1556 = vld [vmem:[%s13 + $0x10] sm:$0xff]
        %v1557 = vld [vmem:[%s13 + $0x18] sm:$0xff]
        %v1558 = vld [vmem:[%s13 + $0x20] sm:$0xff]
        %v1559 = vld [vmem:[%s13 + $0x28] sm:$0xff]
        %v1560 = vld [vmem:[%s13 + $0x30] sm:$0xff]
        %v1561 = vld [vmem:[%s13 + $0x38] sm:$0xff]
        %v1562 = vld [vmem:[%s14] sm:$0x1]
        %v1564 = vlaneseq
        %v1565 = vshrl.u32 %v1564, 7
        %v1566 = vsub.s32 0, %v1565
        %v1567 = vrot.slane %v1562, %v1566
        %v1570 = vsel %vm947, %v1553, 0
        %1572 = vmatprep.subr.mxu0 0.0
        %1573 = vmatpush1.msra.mxu0 %v1554
        %1574 = vmatprep.subr.mxu0 0.0
        %1575 = vmatpush1.msra.mxu0 %v1555
        %1576 = vmatprep.subr.mxu0 0.0
        %1577 = vmatpush1.msra.mxu0 %v1556
        %1578 = vmatprep.subr.mxu0 0.0
        %1579 = vmatpush1.msra.mxu0 %v1557
        %1580 = vmatprep.subr.mxu0 0.0
        %1581 = vmatpush1.msra.mxu0 %v1558
        %1582 = vmatprep.subr.mxu0 0.0
        %1583 = vmatpush1.msra.mxu0 %v1559
        %1584 = vmatprep.subr.mxu0 0.0
        %1585 = vmatpush1.msra.mxu0 %v1560
        %1586 = vmatprep.subr.mxu0 0.0
        %1587 = vmatpush1.msra.mxu0 %v1561
        %1588 = vmatprep.subr.mxu0 0.0
        %1589 = vmatpush1.msra.mxu0 0.0
        %1590 = vmatprep.subr.mxu0 0.0
        %1591 = vmatpush1.msra.mxu0 0.0
        %1592 = vmatprep.subr.mxu0 0.0
        %1593 = vmatpush1.msra.mxu0 0.0
        %1594 = vmatprep.subr.mxu0 0.0
        %1595 = vmatpush1.msra.mxu0 0.0
        %1596 = vmatprep.subr.mxu0 0.0
        %1597 = vmatpush1.msra.mxu0 0.0
        %1598 = vmatprep.subr.mxu0 0.0
        %1599 = vmatpush1.msra.mxu0 0.0
        %1600 = vmatprep.subr.mxu0 0.0
        %1601 = vmatpush1.msra.mxu0 0.0
        %1602 = vmatprep.subr.mxu0 0.0
        %1603 = vmatpush1.msra.mxu0 0.0
        %1604 = vmatprep.subr.mxu0 0.0
        %1605 = vmatpush1.msra.mxu0 0.0
        %1606 = vmatprep.subr.mxu0 0.0
        %1607 = vmatpush1.msra.mxu0 0.0
        %1608 = vmatprep.subr.mxu0 0.0
        %1609 = vmatpush1.msra.mxu0 0.0
        %1610 = vmatprep.subr.mxu0 0.0
        %1611 = vmatpush1.msra.mxu0 0.0
        %1612 = vmatprep.subr.mxu0 0.0
        %1613 = vmatpush1.msra.mxu0 0.0
        %1614 = vmatprep.subr.mxu0 0.0
        %1615 = vmatpush1.msra.mxu0 0.0
        %1616 = vmatprep.subr.mxu0 0.0
        %1617 = vmatpush1.msra.mxu0 0.0
        %1618 = vmatprep.subr.mxu0 0.0
        %1619 = vmatpush1.msra.mxu0 0.0
        %1620 = vmatprep.subr.mxu0 0.0
        %1621 = vmatpush1.msra.mxu0 0.0
        %1622 = vmatprep.subr.mxu0 0.0
        %1623 = vmatpush1.msra.mxu0 0.0
        %1624 = vmatprep.subr.mxu0 0.0
        %1625 = vmatpush1.msra.mxu0 0.0
        %1626 = vmatprep.subr.mxu0 0.0
        %1627 = vmatpush1.msra.mxu0 0.0
        %1628 = vmatprep.subr.mxu0 0.0
        %1629 = vmatpush1.msra.mxu0 0.0
        %1630 = vmatprep.subr.mxu0 0.0
        %1631 = vmatpush1.msra.mxu0 0.0
        %1632 = vmatprep.subr.mxu0 0.0
        %1633 = vmatpush1.msra.mxu0 0.0
        %1634 = vmatprep.subr.mxu0 0.0
        %1635 = vmatpush1.msra.mxu0 0.0
        %1636 = vmatprep.mubr.f32.mxu0 0.0
        %1637 = vmatmul.mubr.f32.gmra.mrb[0].mxu0 %v1570
        %v1638 = vpop.f32.mrb[0].mxu0
        %v1639 = vadd.f32 %v1567, %v1638
        %v1640 = vpop.f32.mrb[0].mxu0
        %1641 = vdwg.mxu0
        %v1642 = vmax.f32 %v1639, 0.0
        %v1643 = vld [vmem:[%s15] sm:$0x1]
        %v1644 = vld [vmem:[#allocation2] sm:$0x1]
        %1646 = vset.pattern.permute.xlu0 0
        %1647 = vperm.xlu0 %1646, %v1644
        %v1648 = vpop.permute.xlu0 %1647
        %v1650 = vlaneseq
        %v1651 = vshrl.u32 %v1650, 7
        %v1652 = vsub.s32 0, %v1651
        %v1653 = vrot.slane %v1648, %v1652
        %vm1654 = vcmask 261120
        %v1656 = vsel %vm1654, %v1643, 0
        %v1659 = vsel %vm1654, %v1642, 0
        %1661 = vmatprep.subr.mxu0 0.0
        %1662 = vmatpush1.xpose.msra.mxu0 %v1659
        %1663 = vmatprep.subr.mxu0 0.0
        %1664 = vmatpush1.xpose.msra.mxu0 0.0
        %1665 = vmatprep.subr.mxu0 0.0
        %1666 = vmatpush1.xpose.msra.mxu0 0.0
        %1667 = vmatprep.subr.mxu0 0.0
        %1668 = vmatpush1.xpose.msra.mxu0 0.0
        %1669 = vmatprep.subr.mxu0 0.0
        %1670 = vmatpush1.xpose.msra.mxu0 0.0
        %1671 = vmatprep.subr.mxu0 0.0
        %1672 = vmatpush1.xpose.msra.mxu0 0.0
        %1673 = vmatprep.subr.mxu0 0.0
        %1674 = vmatpush1.xpose.msra.mxu0 0.0
        %1675 = vmatprep.subr.mxu0 0.0
        %1676 = vmatpush1.xpose.msra.mxu0 0.0
        %1677 = vmatprep.subr.mxu0 0.0
        %1678 = vmatpush1.xpose.msra.mxu0 0.0
        %1679 = vmatprep.subr.mxu0 0.0
        %1680 = vmatpush1.xpose.msra.mxu0 0.0
        %1681 = vmatprep.subr.mxu0 0.0
        %1682 = vmatpush1.xpose.msra.mxu0 0.0
        %1683 = vmatprep.subr.mxu0 0.0
        %1684 = vmatpush1.xpose.msra.mxu0 0.0
        %1685 = vmatprep.subr.mxu0 0.0
        %1686 = vmatpush1.xpose.msra.mxu0 0.0
        %1687 = vmatprep.subr.mxu0 0.0
        %1688 = vmatpush1.xpose.msra.mxu0 0.0
        %1689 = vmatprep.subr.mxu0 0.0
        %1690 = vmatpush1.xpose.msra.mxu0 0.0
        %1691 = vmatprep.subr.mxu0 0.0
        %1692 = vmatpush1.xpose.msra.mxu0 0.0
        %1693 = vmatprep.subr.mxu0 0.0
        %1694 = vmatpush1.xpose.msra.mxu0 0.0
        %1695 = vmatprep.subr.mxu0 0.0
        %1696 = vmatpush1.xpose.msra.mxu0 0.0
        %1697 = vmatprep.subr.mxu0 0.0
        %1698 = vmatpush1.xpose.msra.mxu0 0.0
        %1699 = vmatprep.subr.mxu0 0.0
        %1700 = vmatpush1.xpose.msra.mxu0 0.0
        %1701 = vmatprep.subr.mxu0 0.0
        %1702 = vmatpush1.xpose.msra.mxu0 0.0
        %1703 = vmatprep.subr.mxu0 0.0
        %1704 = vmatpush1.xpose.msra.mxu0 0.0
        %1705 = vmatprep.subr.mxu0 0.0
        %1706 = vmatpush1.xpose.msra.mxu0 0.0
        %1707 = vmatprep.subr.mxu0 0.0
        %1708 = vmatpush1.xpose.msra.mxu0 0.0
        %1709 = vmatprep.subr.mxu0 0.0
        %1710 = vmatpush1.xpose.msra.mxu0 0.0
        %1711 = vmatprep.subr.mxu0 0.0
        %1712 = vmatpush1.xpose.msra.mxu0 0.0
        %1713 = vmatprep.subr.mxu0 0.0
        %1714 = vmatpush1.xpose.msra.mxu0 0.0
        %1715 = vmatprep.subr.mxu0 0.0
        %1716 = vmatpush1.xpose.msra.mxu0 0.0
        %1717 = vmatprep.subr.mxu0 0.0
        %1718 = vmatpush1.xpose.msra.mxu0 0.0
        %1719 = vmatprep.subr.mxu0 0.0
        %1720 = vmatpush1.xpose.msra.mxu0 0.0
        %1721 = vmatprep.subr.mxu0 0.0
        %1722 = vmatpush1.xpose.msra.mxu0 0.0
        %1723 = vmatprep.subr.mxu0 0.0
        %1724 = vmatpush1.xpose.msra.mxu0 0.0
        %1725 = vmatprep.mubr.f32.mxu0 0.0
        %1726 = vmatmul.mubr.f32.gmra.mrb[0].mxu0 %v1656
        %v1727 = vpop.f32.mrb[0].mxu0
        %v1728 = vadd.f32 %v1653, %v1727
        %v1729 = vpop.f32.mrb[0].mxu0
        %1730 = vdwg.mxu0
        %vm1731 = vcmask 57344
        %1732 = vst.msk [vmem:[%s555] sm:$0x1] %vm1731, %v1728
        %s1733 = sand.u32 %s408, 1
        %s1734 = scalar_lea.sflag [#allocation4], %s1733
        %s1735 = sand.u32 %s408, 1
        %s1736 = scalar_lea.vmem [#allocation3], %s1735
        // Predicated region
        $region89: #{tpu_custom_call.1} parent=87 // pred_check
          %p1737 = pneg %p418
        $region90: #{tpu_custom_call.1} parent=87 // pred_check_branch
          %1739 = sbr.rel (%p1737) target = $region92
        $region91: #{tpu_custom_call.1} parent=87 // pred_region
          %s1741 = ssub.s32 16, 16
          %1742 = vsyncadd %s1734, %s1741
          %s1743 = smul.addr %s33, 16
          %s1744 = scalar_lea.hbm %s17, %s1743
          %s1746 = sshll.u32 %s1736, 4
          %s1747 = int_to_ptr.vmem [resolvable:$true] %s1746
          %1749 = dma.vmem_to_hbm [thread:$0]  %s1747, 16, %s1744, %s1734
        $region92: #{tpu_custom_call.1} parent=87 // pred_fallthru
          _
      $region88: #{tpu_custom_call.1} parent=5 // pred_fallthru
        _
      %p1750 = scmp.le.s32.totalorder 2, %s28
      // Predicated region
      $region93: #{tpu_custom_call.1} parent=5 // pred_check
        %p1751 = pneg %p1750
      $region94: #{tpu_custom_call.1} parent=5 // pred_check_branch
        %1753 = sbr.rel (%p1751) target = $region96
      $region95: #{tpu_custom_call.1} parent=5 // pred_region
        %s1754 = ssub.s32 %s28, 2
        // Predicated region
        $region97: #{tpu_custom_call.1} parent=95 // pred_check
          %p1755 = pneg %p424
        $region98: #{tpu_custom_call.1} parent=95 // pred_check_branch
          %1757 = sbr.rel (%p1755) target = $region100
        $region99: #{tpu_custom_call.1} parent=95 // pred_region
          %s1758 = sand.u32 %s409, 1
          %s1759 = scalar_lea.sflag [#allocation4], %s1758
          %s1760 = sand.u32 %s409, 1
          %s1761 = scalar_lea.vmem [#allocation3], %s1760
          %1762 = dma.done %s1759, 16
        $region100: #{tpu_custom_call.1} parent=95 // pred_fallthru
          _
      $region96: #{tpu_custom_call.1} parent=5 // pred_fallthru
        _
    $region6: #{tpu_custom_call.1} parent=1 // loop_footer
      %s32 = sadd.s32 1, %s28
    $region7: #{tpu_custom_call.1} parent=1 // loop_footer_branch
      %27 = sbr.rel target = $region3
    $region8: #{tpu_custom_call.1} parent=1 // loop_exit
      _
    %1763 = vsyncpa [#allocation4], 1
    %s1764 = scalar_lea.sflag [#allocation4], 1
    %1765 = vsyncpa %s1764, 1

</llo_original>
